<compile_context>
chip_gen: v7x
topology: tpu7x:2x2x1
jax: 0.10.0
libtpu: 0.0.40
codegen_flags: <defaults>
</compile_context>

<pallas_src>
import jax
import jax.numpy as jnp
from jax import lax
from jax.experimental import pallas as pl
from jax.experimental.pallas import tpu as pltpu


# ------------------------------ kernel helpers -------------------------------

def _reflect_pad_hw(x):
    """(H, W, C) -> (H+2, W+2, C), matching torch ReflectionPad2d(1)."""
    x = jnp.concatenate([x[1:2], x, x[-2:-1]], axis=0)          # rows
    x = jnp.concatenate([x[:, 1:2], x, x[:, -2:-1]], axis=1)    # cols
    return x


def _im2col_3x3(xp, H, W):
    """(H+2, W+2, C) -> (H*W, 9*C) patch matrix (tap-major, channel-minor)."""
    C = xp.shape[-1]
    taps = [xp[dy:dy + H, dx:dx + W, :].reshape(H * W, C)
            for dy in range(3) for dx in range(3)]
    return jnp.concatenate(taps, axis=1)


def _cm_to_hwc(x_cm, H, W):
    """(C, H*W) channel-major -> (H, W, C).

    Sublane-pads C up to a multiple of 8 so the 2-D minor-dim transpose runs
    on a tile-aligned operand, then drops the padding.
    """
    C, HW = x_cm.shape
    Cp = ((C + 7) // 8) * 8
    if Cp != C:
        x_cm = jnp.concatenate(
            [x_cm, jnp.zeros((Cp - C, HW), x_cm.dtype)], axis=0)
    return jnp.transpose(x_cm)[:, :C].reshape(H, W, C)


# --------------------------------- kernel ------------------------------------

def _make_kernel(H, W, C):
    HW = H * W

    def kernel(x_ref, w1_ref, b1_ref, w2_ref, b2_ref, a_ref, o_ref):
        # x_ref: (1, C, H*W) channel-major (flattened NCHW) block.
        x_cm = x_ref[0].astype(jnp.float32)                   # (C, H*W)
        x_hwc = _cm_to_hwc(x_cm, H, W)                        # (H, W, C)

        # ---- conv1 + bias + PReLU (single im2col matmul, K = 9*C) ----------
        p1 = _im2col_3x3(_reflect_pad_hw(x_hwc), H, W)        # (H*W, 9C)
        h = jnp.dot(p1, w1_ref[...], preferred_element_type=jnp.float32)
        h = h + b1_ref[...]                                   # (1, C) bcast
        a = a_ref[0, 0]                                       # shared slope
        # nn.PReLU() default (num_parameters=1).  Per-channel slopes would be
        # a (1, C) VMEM input broadcast here instead.
        h = jnp.where(h >= 0, h, a * h)

        # ---- conv2 (h never leaves VMEM), output channel-major (C, H*W) ----
        p2 = _im2col_3x3(_reflect_pad_hw(h.reshape(H, W, C)), H, W)
        y = lax.dot_general(w2_ref[...], p2,
                            (((1,), (1,)), ((), ())),         # contract 9C dims
                            preferred_element_type=jnp.float32)   # (C, H*W)
        y = y + b2_ref[...]                                   # (C, 1) bcast

        # ---- scale + residual + lane-dense store (last dim = H*W) ----------
        out = y * 0.1 + x_cm
        o_ref[...] = out.reshape(1, C, HW).astype(o_ref.dtype)

    return kernel


# --------------------------- pallas_call wrapper -----------------------------

def residual_block(x_nchw, w1, b1, w2, b2, prelu_a):
    """x_nchw: (N, C, H, W); conv weights in PyTorch layout (C_out, C_in, 3, 3)."""
    N, C, H, W = x_nchw.shape
    HW = H * W

    x_flat = x_nchw.reshape(N, C, HW)                         # free (contiguous)
    # (Cout, Cin, 3, 3) -> (9*Cin, Cout): rows ordered tap-major, channel-minor
    w1k = jnp.transpose(w1, (2, 3, 1, 0)).reshape(9 * C, C)
    # (Cout, Cin, 3, 3) -> (Cout, 9*Cin): cols ordered tap-major, channel-minor
    w2k = jnp.transpose(w2, (0, 2, 3, 1)).reshape(C, 9 * C)
    b1k = b1.reshape(1, C)
    b2k = b2.reshape(C, 1)
    ak = jnp.asarray(prelu_a, jnp.float32).reshape(1, 1)

    out_flat = pl.pallas_call(
        _make_kernel(H, W, C),
        out_shape=jax.ShapeDtypeStruct((N, C, HW), x_nchw.dtype),
        grid=(N,),
        in_specs=[
            pl.BlockSpec((1, C, HW), lambda n: (n, 0, 0)),        # x (chan-major)
            pl.BlockSpec((9 * C, C), lambda n: (0, 0)),           # w1 (im2col)
            pl.BlockSpec((1, C), lambda n: (0, 0)),               # b1
            pl.BlockSpec((C, 9 * C), lambda n: (0, 0)),           # w2 (im2col, T)
            pl.BlockSpec((C, 1), lambda n: (0, 0)),               # b2
            pl.BlockSpec(memory_space=pltpu.MemorySpace.SMEM),    # PReLU slope
        ],
        out_specs=pl.BlockSpec((1, C, HW), lambda n: (n, 0, 0)),
        compiler_params=pltpu.CompilerParams(
            dimension_semantics=("parallel",)),
    )(x_flat, w1k, b1k, w2k, b2k, ak)

    return out_flat.reshape(N, C, H, W)


# ------------------------------ reference ------------------------------------

def residual_block_ref(x_nchw, w1, b1, w2, b2, prelu_a):
    def conv(x, w, b):
        xp = jnp.pad(x, ((0, 0), (0, 0), (1, 1), (1, 1)), mode='reflect')
        y = lax.conv_general_dilated(
            xp, w, window_strides=(1, 1), padding='VALID',
            dimension_numbers=('NCHW', 'OIHW', 'NCHW'))
        return y + b.reshape(1, -1, 1, 1)

    h = conv(x_nchw, w1, b1)
    h = jnp.where(h >= 0, h, prelu_a * h)
    return conv(h, w2, b2) * 0.1 + x_nchw


# -------------------------------- main ---------------------------------------

if __name__ == "__main__":
    N, C, H, W = 2, 4, 16, 16
    key = jax.random.PRNGKey(0)
    kx, kw1, kb1, kw2, kb2 = jax.random.split(key, 5)

    x = jax.random.normal(kx, (N, C, H, W), dtype=jnp.float32)
    # Deterministic synthetic parameters (PyTorch Conv2d layout).
    w1 = 0.1 * jax.random.normal(kw1, (C, C, 3, 3), dtype=jnp.float32)
    b1 = 0.05 * jax.random.normal(kb1, (C,), dtype=jnp.float32)
    w2 = 0.1 * jax.random.normal(kw2, (C, C, 3, 3), dtype=jnp.float32)
    b2 = 0.05 * jax.random.normal(kb2, (C,), dtype=jnp.float32)
    prelu_a = jnp.array(0.25, dtype=jnp.float32)   # nn.PReLU() default init

    out = jax.jit(residual_block)(x, w1, b1, w2, b2, prelu_a)
    out = jax.block_until_ready(out)

    ref = residual_block_ref(x, w1, b1, w2, b2, prelu_a)
    assert out.shape == (N, C, H, W)
    assert jnp.allclose(out, ref, atol=1e-5, rtol=1e-5), "mismatch vs reference"
    print("KERNEL_OK")
</pallas_src>

<mosaic_0001>
module attributes {stable_mosaic.version = 11 : i64} {
  func.func @kernel(%arg0: i32, %arg1: memref<1x4x256xf32, #tpu.memory_space<vmem>>, %arg2: memref<36x4xf32, #tpu.memory_space<vmem>>, %arg3: memref<1x4xf32, #tpu.memory_space<vmem>>, %arg4: memref<4x36xf32, #tpu.memory_space<vmem>>, %arg5: memref<4x1xf32, #tpu.memory_space<vmem>>, %arg6: memref<1x1xf32, #tpu.memory_space<smem>>, %arg7: memref<1x4x256xf32, #tpu.memory_space<vmem>>) attributes {dimension_semantics = [#tpu.dimension_semantics<parallel>], iteration_bounds = array<i64: 2>, scalar_prefetch = 0 : i64, scratch_operands = 0 : i64, tpu.core_type = #tpu.core_type<tc>, window_params = [{transform_indices = @transform_0, window_bounds = array<i64: 1, 4, 256>}, {pipeline_mode = #tpu.pipeline_mode<synchronous>, transform_indices = @transform_1, window_bounds = array<i64: 36, 4>}, {pipeline_mode = #tpu.pipeline_mode<synchronous>, transform_indices = @transform_2, window_bounds = array<i64: 1, 4>}, {pipeline_mode = #tpu.pipeline_mode<synchronous>, transform_indices = @transform_3, window_bounds = array<i64: 4, 36>}, {pipeline_mode = #tpu.pipeline_mode<synchronous>, transform_indices = @transform_4, window_bounds = array<i64: 4, 1>}, {transform_indices = @transform_5, window_bounds = array<i64: 1, 1>}, {transform_indices = @transform_6, window_bounds = array<i64: 1, 4, 256>}]} {
    %c0 = arith.constant 0 : index
    %c0_0 = arith.constant 0 : index
    %c0_1 = arith.constant 0 : index
    %0 = vector.load %arg1[%c0, %c0_0, %c0_1] : memref<1x4x256xf32, #tpu.memory_space<vmem>>, vector<1x4x256xf32>
    %1 = vector.shape_cast %0 : vector<1x4x256xf32> to vector<4x256xf32>
    %cst = arith.constant 0.000000e+00 : f32
    %2 = vector.broadcast %cst : f32 to vector<4x256xf32>
    %3 = tpu.concatenate %1, %2 in 0 : vector<4x256xf32>, vector<4x256xf32> -> vector<8x256xf32>
    %4 = tpu.transpose %3, [1, 0] : vector<8x256xf32> -> vector<256x8xf32>
    %5 = vector.extract_strided_slice %4 {offsets = [0, 0], sizes = [256, 4], strides = [1, 1]} : vector<256x8xf32> to vector<256x4xf32>
    %6 = vector.shape_cast %5 : vector<256x4xf32> to vector<16x16x4xf32>
    %7 = vector.extract_strided_slice %6 {offsets = [1, 0, 0], sizes = [1, 16, 4], strides = [1, 1, 1]} : vector<16x16x4xf32> to vector<1x16x4xf32>
    %8 = vector.extract_strided_slice %6 {offsets = [14, 0, 0], sizes = [1, 16, 4], strides = [1, 1, 1]} : vector<16x16x4xf32> to vector<1x16x4xf32>
    %9 = tpu.concatenate %7, %6, %8 in 0 : vector<1x16x4xf32>, vector<16x16x4xf32>, vector<1x16x4xf32> -> vector<18x16x4xf32>
    %10 = vector.extract_strided_slice %9 {offsets = [0, 1, 0], sizes = [18, 1, 4], strides = [1, 1, 1]} : vector<18x16x4xf32> to vector<18x1x4xf32>
    %11 = vector.extract_strided_slice %9 {offsets = [0, 14, 0], sizes = [18, 1, 4], strides = [1, 1, 1]} : vector<18x16x4xf32> to vector<18x1x4xf32>
    %12 = tpu.concatenate %10, %9, %11 in 1 : vector<18x1x4xf32>, vector<18x16x4xf32>, vector<18x1x4xf32> -> vector<18x18x4xf32>
    %13 = vector.extract_strided_slice %12 {offsets = [0, 0, 0], sizes = [16, 16, 4], strides = [1, 1, 1]} : vector<18x18x4xf32> to vector<16x16x4xf32>
    %14 = vector.shape_cast %13 : vector<16x16x4xf32> to vector<256x4xf32>
    %15 = vector.extract_strided_slice %12 {offsets = [0, 1, 0], sizes = [16, 16, 4], strides = [1, 1, 1]} : vector<18x18x4xf32> to vector<16x16x4xf32>
    %16 = vector.shape_cast %15 : vector<16x16x4xf32> to vector<256x4xf32>
    %17 = vector.extract_strided_slice %12 {offsets = [0, 2, 0], sizes = [16, 16, 4], strides = [1, 1, 1]} : vector<18x18x4xf32> to vector<16x16x4xf32>
    %18 = vector.shape_cast %17 : vector<16x16x4xf32> to vector<256x4xf32>
    %19 = vector.extract_strided_slice %12 {offsets = [1, 0, 0], sizes = [16, 16, 4], strides = [1, 1, 1]} : vector<18x18x4xf32> to vector<16x16x4xf32>
    %20 = vector.shape_cast %19 : vector<16x16x4xf32> to vector<256x4xf32>
    %21 = vector.extract_strided_slice %12 {offsets = [1, 1, 0], sizes = [16, 16, 4], strides = [1, 1, 1]} : vector<18x18x4xf32> to vector<16x16x4xf32>
    %22 = vector.shape_cast %21 : vector<16x16x4xf32> to vector<256x4xf32>
    %23 = vector.extract_strided_slice %12 {offsets = [1, 2, 0], sizes = [16, 16, 4], strides = [1, 1, 1]} : vector<18x18x4xf32> to vector<16x16x4xf32>
    %24 = vector.shape_cast %23 : vector<16x16x4xf32> to vector<256x4xf32>
    %25 = vector.extract_strided_slice %12 {offsets = [2, 0, 0], sizes = [16, 16, 4], strides = [1, 1, 1]} : vector<18x18x4xf32> to vector<16x16x4xf32>
    %26 = vector.shape_cast %25 : vector<16x16x4xf32> to vector<256x4xf32>
    %27 = vector.extract_strided_slice %12 {offsets = [2, 1, 0], sizes = [16, 16, 4], strides = [1, 1, 1]} : vector<18x18x4xf32> to vector<16x16x4xf32>
    %28 = vector.shape_cast %27 : vector<16x16x4xf32> to vector<256x4xf32>
    %29 = vector.extract_strided_slice %12 {offsets = [2, 2, 0], sizes = [16, 16, 4], strides = [1, 1, 1]} : vector<18x18x4xf32> to vector<16x16x4xf32>
    %30 = vector.shape_cast %29 : vector<16x16x4xf32> to vector<256x4xf32>
    %31 = tpu.concatenate %14, %16, %18, %20, %22, %24, %26, %28, %30 in 1 : vector<256x4xf32>, vector<256x4xf32>, vector<256x4xf32>, vector<256x4xf32>, vector<256x4xf32>, vector<256x4xf32>, vector<256x4xf32>, vector<256x4xf32>, vector<256x4xf32> -> vector<256x36xf32>
    %c0_2 = arith.constant 0 : index
    %c0_3 = arith.constant 0 : index
    %32 = vector.load %arg2[%c0_2, %c0_3] : memref<36x4xf32, #tpu.memory_space<vmem>>, vector<36x4xf32>
    %cst_4 = arith.constant dense<0.000000e+00> : vector<256x4xf32>
    %33 = tpu.matmul %31, %32, %cst_4 {dimension_numbers = #tpu.dot_dimension_numbers<[1], [0], [0], [1], [0, 0, 1, 1], [], []>} : vector<256x36xf32>, vector<36x4xf32>, vector<256x4xf32> -> vector<256x4xf32>
    %c0_5 = arith.constant 0 : index
    %c0_6 = arith.constant 0 : index
    %34 = vector.load %arg3[%c0_5, %c0_6] : memref<1x4xf32, #tpu.memory_space<vmem>>, vector<1x4xf32>
    %35 = vector.broadcast %34 : vector<1x4xf32> to vector<256x4xf32>
    %36 = arith.addf %33, %35 : vector<256x4xf32>
    %c0_7 = arith.constant 0 : index
    %c0_8 = arith.constant 0 : index
    %37 = memref.load %arg6[%c0_7, %c0_8] : memref<1x1xf32, #tpu.memory_space<smem>>
    %cst_9 = arith.constant 0.000000e+00 : f32
    %38 = vector.broadcast %cst_9 : f32 to vector<256x4xf32>
    %39 = arith.cmpf oge, %36, %38 : vector<256x4xf32>
    %40 = vector.broadcast %37 : f32 to vector<256x4xf32>
    %41 = arith.mulf %40, %36 : vector<256x4xf32>
    %42 = arith.select %39, %36, %41 : vector<256x4xi1>, vector<256x4xf32>
    %43 = vector.shape_cast %42 : vector<256x4xf32> to vector<16x16x4xf32>
    %44 = vector.extract_strided_slice %43 {offsets = [1, 0, 0], sizes = [1, 16, 4], strides = [1, 1, 1]} : vector<16x16x4xf32> to vector<1x16x4xf32>
    %45 = vector.extract_strided_slice %43 {offsets = [14, 0, 0], sizes = [1, 16, 4], strides = [1, 1, 1]} : vector<16x16x4xf32> to vector<1x16x4xf32>
    %46 = tpu.concatenate %44, %43, %45 in 0 : vector<1x16x4xf32>, vector<16x16x4xf32>, vector<1x16x4xf32> -> vector<18x16x4xf32>
    %47 = vector.extract_strided_slice %46 {offsets = [0, 1, 0], sizes = [18, 1, 4], strides = [1, 1, 1]} : vector<18x16x4xf32> to vector<18x1x4xf32>
    %48 = vector.extract_strided_slice %46 {offsets = [0, 14, 0], sizes = [18, 1, 4], strides = [1, 1, 1]} : vector<18x16x4xf32> to vector<18x1x4xf32>
    %49 = tpu.concatenate %47, %46, %48 in 1 : vector<18x1x4xf32>, vector<18x16x4xf32>, vector<18x1x4xf32> -> vector<18x18x4xf32>
    %50 = vector.extract_strided_slice %49 {offsets = [0, 0, 0], sizes = [16, 16, 4], strides = [1, 1, 1]} : vector<18x18x4xf32> to vector<16x16x4xf32>
    %51 = vector.shape_cast %50 : vector<16x16x4xf32> to vector<256x4xf32>
    %52 = vector.extract_strided_slice %49 {offsets = [0, 1, 0], sizes = [16, 16, 4], strides = [1, 1, 1]} : vector<18x18x4xf32> to vector<16x16x4xf32>
    %53 = vector.shape_cast %52 : vector<16x16x4xf32> to vector<256x4xf32>
    %54 = vector.extract_strided_slice %49 {offsets = [0, 2, 0], sizes = [16, 16, 4], strides = [1, 1, 1]} : vector<18x18x4xf32> to vector<16x16x4xf32>
    %55 = vector.shape_cast %54 : vector<16x16x4xf32> to vector<256x4xf32>
    %56 = vector.extract_strided_slice %49 {offsets = [1, 0, 0], sizes = [16, 16, 4], strides = [1, 1, 1]} : vector<18x18x4xf32> to vector<16x16x4xf32>
    %57 = vector.shape_cast %56 : vector<16x16x4xf32> to vector<256x4xf32>
    %58 = vector.extract_strided_slice %49 {offsets = [1, 1, 0], sizes = [16, 16, 4], strides = [1, 1, 1]} : vector<18x18x4xf32> to vector<16x16x4xf32>
    %59 = vector.shape_cast %58 : vector<16x16x4xf32> to vector<256x4xf32>
    %60 = vector.extract_strided_slice %49 {offsets = [1, 2, 0], sizes = [16, 16, 4], strides = [1, 1, 1]} : vector<18x18x4xf32> to vector<16x16x4xf32>
    %61 = vector.shape_cast %60 : vector<16x16x4xf32> to vector<256x4xf32>
    %62 = vector.extract_strided_slice %49 {offsets = [2, 0, 0], sizes = [16, 16, 4], strides = [1, 1, 1]} : vector<18x18x4xf32> to vector<16x16x4xf32>
    %63 = vector.shape_cast %62 : vector<16x16x4xf32> to vector<256x4xf32>
    %64 = vector.extract_strided_slice %49 {offsets = [2, 1, 0], sizes = [16, 16, 4], strides = [1, 1, 1]} : vector<18x18x4xf32> to vector<16x16x4xf32>
    %65 = vector.shape_cast %64 : vector<16x16x4xf32> to vector<256x4xf32>
    %66 = vector.extract_strided_slice %49 {offsets = [2, 2, 0], sizes = [16, 16, 4], strides = [1, 1, 1]} : vector<18x18x4xf32> to vector<16x16x4xf32>
    %67 = vector.shape_cast %66 : vector<16x16x4xf32> to vector<256x4xf32>
    %68 = tpu.concatenate %51, %53, %55, %57, %59, %61, %63, %65, %67 in 1 : vector<256x4xf32>, vector<256x4xf32>, vector<256x4xf32>, vector<256x4xf32>, vector<256x4xf32>, vector<256x4xf32>, vector<256x4xf32>, vector<256x4xf32>, vector<256x4xf32> -> vector<256x36xf32>
    %c0_10 = arith.constant 0 : index
    %c0_11 = arith.constant 0 : index
    %69 = vector.load %arg4[%c0_10, %c0_11] : memref<4x36xf32, #tpu.memory_space<vmem>>, vector<4x36xf32>
    %cst_12 = arith.constant dense<0.000000e+00> : vector<4x256xf32>
    %70 = tpu.matmul %69, %68, %cst_12 {dimension_numbers = #tpu.dot_dimension_numbers<[1], [1], [0], [0], [0, 0, 1, 0], [], []>} : vector<4x36xf32>, vector<256x36xf32>, vector<4x256xf32> -> vector<4x256xf32>
    %c0_13 = arith.constant 0 : index
    %c0_14 = arith.constant 0 : index
    %71 = vector.load %arg5[%c0_13, %c0_14] : memref<4x1xf32, #tpu.memory_space<vmem>>, vector<4x1xf32>
    %72 = vector.broadcast %71 : vector<4x1xf32> to vector<4x256xf32>
    %73 = arith.addf %70, %72 : vector<4x256xf32>
    %cst_15 = arith.constant 1.000000e-01 : f32
    %74 = vector.broadcast %cst_15 : f32 to vector<4x256xf32>
    %75 = arith.mulf %73, %74 : vector<4x256xf32>
    %76 = arith.addf %75, %1 : vector<4x256xf32>
    %77 = vector.shape_cast %76 : vector<4x256xf32> to vector<1x4x256xf32>
    %c0_16 = arith.constant 0 : index
    %c0_17 = arith.constant 0 : index
    %c0_18 = arith.constant 0 : index
    %78 = vector.load %arg7[%c0_16, %c0_17, %c0_18] : memref<1x4x256xf32, #tpu.memory_space<vmem>>, vector<1x4x256xf32>
    tpu.vector_store %arg7[%c0_16, %c0_17, %c0_18], %77 {strides = array<i32>} : memref<1x4x256xf32, #tpu.memory_space<vmem>>, vector<1x4x256xf32>,
    return
  }
  func.func @transform_0(%arg0: i32) -> (i32, i32, i32) {
    %c0_i32 = arith.constant 0 : i32
    %c0_i32_0 = arith.constant 0 : i32
    %c0_i32_1 = arith.constant 0 : i32
    return %arg0, %c0_i32, %c0_i32_0 : i32, i32, i32
  }
  func.func @transform_1(%arg0: i32) -> (i32, i32) {
    %c0_i32 = arith.constant 0 : i32
    %c0_i32_0 = arith.constant 0 : i32
    %c0_i32_1 = arith.constant 0 : i32
    return %c0_i32, %c0_i32_0 : i32, i32
  }
  func.func @transform_2(%arg0: i32) -> (i32, i32) {
    %c0_i32 = arith.constant 0 : i32
    %c0_i32_0 = arith.constant 0 : i32
    %c0_i32_1 = arith.constant 0 : i32
    return %c0_i32, %c0_i32_0 : i32, i32
  }
  func.func @transform_3(%arg0: i32) -> (i32, i32) {
    %c0_i32 = arith.constant 0 : i32
    %c0_i32_0 = arith.constant 0 : i32
    %c0_i32_1 = arith.constant 0 : i32
    return %c0_i32, %c0_i32_0 : i32, i32
  }
  func.func @transform_4(%arg0: i32) -> (i32, i32) {
    %c0_i32 = arith.constant 0 : i32
    %c0_i32_0 = arith.constant 0 : i32
    %c0_i32_1 = arith.constant 0 : i32
    return %c0_i32, %c0_i32_0 : i32, i32
  }
  func.func @transform_5(%arg0: i32) -> (i32, i32) {
    %c0_i32 = arith.constant 0 : i32
    %c0_i32_0 = arith.constant 0 : i32
    %c0_i32_1 = arith.constant 0 : i32
    return %c0_i32, %c0_i32_0 : i32, i32
  }
  func.func @transform_6(%arg0: i32) -> (i32, i32, i32) {
    %c0_i32 = arith.constant 0 : i32
    %c0_i32_0 = arith.constant 0 : i32
    %c0_i32_1 = arith.constant 0 : i32
    return %arg0, %c0_i32, %c0_i32_0 : i32, i32, i32
  }
}

</mosaic_0001>

<llo_original>
// kernel: residual_block.1
$region0: #{residual_block.1}
  #allocation0 [shape = 'u32[]', space=smem, size = 0x4, offset = 0x4, fixed_abs, tag = 'smem constant byte address 0x4 - core index']
  #allocation1 [shape = 'u32[144,128]{1,0:T(1,128)}', space=vmem, size = 0x12000, scoped, tag = 'internal scratch']
  #allocation2 [shape = 'f32[1,1]{1,0:T(1,128)S(6)}', space=smem, size = 0x200, scoped, tag = 'scoped memory for residual_block.1']
  %s0 = inlined_call_operand.vmem [shape: f32[2,4,256], index: 0, kind: input, shape index: {}]
  %s1 = inlined_call_operand.vmem [shape: f32[36,4], index: 1, kind: input, shape index: {}]
  %s2 = inlined_call_operand.vmem [shape: f32[1,4], index: 2, kind: input, shape index: {}]
  %s3 = inlined_call_operand.vmem [shape: f32[4,36], index: 3, kind: input, shape index: {}]
  %s4 = inlined_call_operand.vmem [shape: f32[4,1], index: 4, kind: input, shape index: {}]
  %s5 = inlined_call_operand.<no memory space> [shape: f32[1,1], index: 5, kind: input, shape index: {}]
  %s6 = inlined_call_operand.vmem [shape: f32[2,4,256], index: 6, kind: output, shape index: {}]
  %s7 = sld [smem:[#allocation0]]
  $region57: #{residual_block.1} parent=0
    _
  %s9 = ssub.s32 1, %s7
  %s10 = scalar_select 0, %s9, %s7
  %11 = sst [smem:[#allocation2]] %s5
  loop: start=0, step=1, limit=4
  $region2: #{residual_block.1} parent=0 // loop_pre_header
    _
  $region3: #{residual_block.1} parent=0 // loop_header
    %s13 = sphi 0, %s17
    %p14 = scmp.ge.s32.totalorder %s13, 4
    %s23 = sphi 0, %s25
    %s26 = sphi 0, %s23
    %s27 = sphi 0, %s26
    %s43 = sphi 0, %s27
    %s47 = sphi 0, %s47
    %s49 = sphi 0, %s47
    %s50 = sphi 0, %s49
    %s64 = sphi 0, %s50
    %s68 = sphi 0, %s68
    %s70 = sphi 0, %s68
    %s71 = sphi 0, %s70
    %s85 = sphi 0, %s71
    %s89 = sphi 0, %s89
    %s91 = sphi 0, %s89
    %s92 = sphi 0, %s91
    %s106 = sphi 0, %s92
    %s110 = sphi 0, %s110
    %s112 = sphi 0, %s110
    %s113 = sphi 0, %s112
    %s127 = sphi 0, %s113
    %s131 = sphi 0, %s131
    %s133 = sphi 0, %s131
    %s134 = sphi 0, %s133
    %s148 = sphi 0, %s134
    %s154 = sphi 0, %s156
    %s157 = sphi 0, %s154
    %s158 = sphi 0, %s157
    %s174 = sphi 0, %s158
  $region4: #{residual_block.1} parent=0 // loop_header_branch
    %16 = sbr.rel (%p14) target = $region8
  $region5: #{residual_block.1} parent=0 // loop_body
    %s18 = ssub.s32 %s13, 1
    %s19 = ssub.s32 %s13, 2
    %s20 = sadd.s32 %s13, 1
    %s21 = ssub.s32 %s13, %s20
    %p22 = scmp.eq.s32.totalorder %s21, 0
    %s24 = sadd.s32 %s23, 1
    %s25 = scalar_select %p22, %s23, %s24
    %p28 = pneg %p22
    %p29 = scmp.eq.s32.totalorder %s13, 1
    %p30 = por %p28, %p29
    %p31 = scmp.ne.s32.totalorder %s23, %s26
    %p32 = scmp.eq.s32.totalorder %s13, 0
    %p33 = por %p31, %p32
    %p34 = scmp.ne.s32.totalorder %s23, %s26
    %p35 = scmp.eq.s32.totalorder %s18, 1
    %p36 = por %p34, %p35
    %p37 = scmp.ne.s32.totalorder %s26, %s27
    %p38 = scmp.eq.s32.totalorder %s18, 0
    %p39 = por %p37, %p38
    %p40 = scmp.ne.s32.totalorder %s26, %s27
    %p41 = scmp.eq.s32.totalorder %s19, 1
    %p42 = por %p40, %p41
    %p44 = scmp.ne.s32.totalorder %s27, %s43
    %p45 = scmp.eq.s32.totalorder %s19, 0
    %p46 = por %p44, %p45
    %s48 = sadd.s32 %s47, 1
    %p51 = scmp.eq.s32.totalorder %s13, 1
    %p52 = scmp.ne.s32.totalorder %s47, %s49
    %p53 = scmp.eq.s32.totalorder %s13, 0
    %p54 = por %p52, %p53
    %p55 = scmp.ne.s32.totalorder %s47, %s49
    %p56 = scmp.eq.s32.totalorder %s18, 1
    %p57 = por %p55, %p56
    %p58 = scmp.ne.s32.totalorder %s49, %s50
    %p59 = scmp.eq.s32.totalorder %s18, 0
    %p60 = por %p58, %p59
    %p61 = scmp.ne.s32.totalorder %s49, %s50
    %p62 = scmp.eq.s32.totalorder %s19, 1
    %p63 = por %p61, %p62
    %p65 = scmp.ne.s32.totalorder %s50, %s64
    %p66 = scmp.eq.s32.totalorder %s19, 0
    %p67 = por %p65, %p66
    %s69 = sadd.s32 %s68, 1
    %p72 = scmp.eq.s32.totalorder %s13, 1
    %p73 = scmp.ne.s32.totalorder %s68, %s70
    %p74 = scmp.eq.s32.totalorder %s13, 0
    %p75 = por %p73, %p74
    %p76 = scmp.ne.s32.totalorder %s68, %s70
    %p77 = scmp.eq.s32.totalorder %s18, 1
    %p78 = por %p76, %p77
    %p79 = scmp.ne.s32.totalorder %s70, %s71
    %p80 = scmp.eq.s32.totalorder %s18, 0
    %p81 = por %p79, %p80
    %p82 = scmp.ne.s32.totalorder %s70, %s71
    %p83 = scmp.eq.s32.totalorder %s19, 1
    %p84 = por %p82, %p83
    %p86 = scmp.ne.s32.totalorder %s71, %s85
    %p87 = scmp.eq.s32.totalorder %s19, 0
    %p88 = por %p86, %p87
    %s90 = sadd.s32 %s89, 1
    %p93 = scmp.eq.s32.totalorder %s13, 1
    %p94 = scmp.ne.s32.totalorder %s89, %s91
    %p95 = scmp.eq.s32.totalorder %s13, 0
    %p96 = por %p94, %p95
    %p97 = scmp.ne.s32.totalorder %s89, %s91
    %p98 = scmp.eq.s32.totalorder %s18, 1
    %p99 = por %p97, %p98
    %p100 = scmp.ne.s32.totalorder %s91, %s92
    %p101 = scmp.eq.s32.totalorder %s18, 0
    %p102 = por %p100, %p101
    %p103 = scmp.ne.s32.totalorder %s91, %s92
    %p104 = scmp.eq.s32.totalorder %s19, 1
    %p105 = por %p103, %p104
    %p107 = scmp.ne.s32.totalorder %s92, %s106
    %p108 = scmp.eq.s32.totalorder %s19, 0
    %p109 = por %p107, %p108
    %s111 = sadd.s32 %s110, 1
    %p114 = scmp.eq.s32.totalorder %s13, 1
    %p115 = scmp.ne.s32.totalorder %s110, %s112
    %p116 = scmp.eq.s32.totalorder %s13, 0
    %p117 = por %p115, %p116
    %p118 = scmp.ne.s32.totalorder %s110, %s112
    %p119 = scmp.eq.s32.totalorder %s18, 1
    %p120 = por %p118, %p119
    %p121 = scmp.ne.s32.totalorder %s112, %s113
    %p122 = scmp.eq.s32.totalorder %s18, 0
    %p123 = por %p121, %p122
    %p124 = scmp.ne.s32.totalorder %s112, %s113
    %p125 = scmp.eq.s32.totalorder %s19, 1
    %p126 = por %p124, %p125
    %p128 = scmp.ne.s32.totalorder %s113, %s127
    %p129 = scmp.eq.s32.totalorder %s19, 0
    %p130 = por %p128, %p129
    %s132 = sadd.s32 %s131, 1
    %p135 = scmp.eq.s32.totalorder %s13, 1
    %p136 = scmp.ne.s32.totalorder %s131, %s133
    %p137 = scmp.eq.s32.totalorder %s13, 0
    %p138 = por %p136, %p137
    %p139 = scmp.ne.s32.totalorder %s131, %s133
    %p140 = scmp.eq.s32.totalorder %s18, 1
    %p141 = por %p139, %p140
    %p142 = scmp.ne.s32.totalorder %s133, %s134
    %p143 = scmp.eq.s32.totalorder %s18, 0
    %p144 = por %p142, %p143
    %p145 = scmp.ne.s32.totalorder %s133, %s134
    %p146 = scmp.eq.s32.totalorder %s19, 1
    %p147 = por %p145, %p146
    %p149 = scmp.ne.s32.totalorder %s134, %s148
    %p150 = scmp.eq.s32.totalorder %s19, 0
    %p151 = por %p149, %p150
    %s152 = ssub.s32 %s13, %s20
    %p153 = scmp.eq.s32.totalorder %s152, 0
    %s155 = sadd.s32 %s154, 1
    %s156 = scalar_select %p153, %s154, %s155
    %p159 = pneg %p153
    %p160 = scmp.eq.s32.totalorder %s13, 1
    %p161 = por %p159, %p160
    %p162 = scmp.ne.s32.totalorder %s154, %s157
    %p163 = scmp.eq.s32.totalorder %s13, 0
    %p164 = por %p162, %p163
    %p165 = scmp.ne.s32.totalorder %s154, %s157
    %p166 = scmp.eq.s32.totalorder %s18, 1
    %p167 = por %p165, %p166
    %p168 = scmp.ne.s32.totalorder %s157, %s158
    %p169 = scmp.eq.s32.totalorder %s18, 0
    %p170 = por %p168, %p169
    %p171 = scmp.ne.s32.totalorder %s157, %s158
    %p172 = scmp.eq.s32.totalorder %s19, 1
    %p173 = por %p171, %p172
    %p175 = scmp.ne.s32.totalorder %s158, %s174
    %p176 = scmp.eq.s32.totalorder %s19, 0
    %p177 = por %p175, %p176
    %p178 = scmp.le.s32.totalorder 1, %s13
    %p179 = scmp.lt.s32.totalorder %s13, 3
    %p180 = pnand %p178, %p179
    %p181 = pneg %p180
    // Predicated region
    $region9: #{residual_block.1} parent=5 // pred_check
      _
    $region10: #{residual_block.1} parent=5 // pred_check_branch
      %183 = sbr.rel (%p180) target = $region12
    $region11: #{residual_block.1} parent=5 // pred_region
      %s184 = ssub.s32 %s13, 1
      // Predicated region
      $region13: #{residual_block.1} parent=11 // pred_check
        %p185 = pneg %p60
      $region14: #{residual_block.1} parent=11 // pred_check_branch
        %187 = sbr.rel (%p185) target = $region16
      $region15: #{residual_block.1} parent=11 // pred_region
        _
      $region16: #{residual_block.1} parent=11 // pred_fallthru
        _
      // Predicated region
      $region17: #{residual_block.1} parent=11 // pred_check
        %p188 = pneg %p81
      $region18: #{residual_block.1} parent=11 // pred_check_branch
        %190 = sbr.rel (%p188) target = $region20
      $region19: #{residual_block.1} parent=11 // pred_region
        _
      $region20: #{residual_block.1} parent=11 // pred_fallthru
        _
      // Predicated region
      $region21: #{residual_block.1} parent=11 // pred_check
        %p191 = pneg %p102
      $region22: #{residual_block.1} parent=11 // pred_check_branch
        %193 = sbr.rel (%p191) target = $region24
      $region23: #{residual_block.1} parent=11 // pred_region
        _
      $region24: #{residual_block.1} parent=11 // pred_fallthru
        _
      // Predicated region
      $region25: #{residual_block.1} parent=11 // pred_check
        %p194 = pneg %p123
      $region26: #{residual_block.1} parent=11 // pred_check_branch
        %196 = sbr.rel (%p194) target = $region28
      $region27: #{residual_block.1} parent=11 // pred_region
        _
      $region28: #{residual_block.1} parent=11 // pred_fallthru
        _
      // Predicated region
      $region29: #{residual_block.1} parent=11 // pred_check
        %p197 = pneg %p144
      $region30: #{residual_block.1} parent=11 // pred_check_branch
        %199 = sbr.rel (%p197) target = $region32
      $region31: #{residual_block.1} parent=11 // pred_region
        _
      $region32: #{residual_block.1} parent=11 // pred_fallthru
        _
    $region12: #{residual_block.1} parent=5 // pred_fallthru
      _
    %p200 = scmp.lt.s32.totalorder %s13, 2
    // Predicated region
    $region33: #{residual_block.1} parent=5 // pred_check
      %p201 = pneg %p200
    $region34: #{residual_block.1} parent=5 // pred_check_branch
      %203 = sbr.rel (%p201) target = $region36
    $region35: #{residual_block.1} parent=5 // pred_region
      // Predicated region
      $region37: #{residual_block.1} parent=35 // pred_check
        %p204 = pneg %p33
      $region38: #{residual_block.1} parent=35 // pred_check_branch
        %206 = sbr.rel (%p204) target = $region40
      $region39: #{residual_block.1} parent=35 // pred_region
        %p207 = scmp.lt.s32.totalorder %s13, 1
        %s208 = scalar_select %p207, %s13, 1
        %s209 = smul.addr %s208, 2
        %s210 = smul.addr %s209, 4
        %s211 = scalar_lea.vmem %s0, %s210
      $region40: #{residual_block.1} parent=35 // pred_fallthru
        _
    $region36: #{residual_block.1} parent=5 // pred_fallthru
      _
    %p212 = scmp.le.s32.totalorder 1, %s13
    %p213 = scmp.lt.s32.totalorder %s13, 3
    %p214 = pnand %p212, %p213
    %p215 = pneg %p214
    // Predicated region
    $region41: #{residual_block.1} parent=5 // pred_check
      _
    $region42: #{residual_block.1} parent=5 // pred_check_branch
      %217 = sbr.rel (%p214) target = $region44
    $region43: #{residual_block.1} parent=5 // pred_region
      %s218 = ssub.s32 %s13, 1
      %p219 = scmp.lt.s32.totalorder %s18, 1
      %s220 = scalar_select %p219, %s18, 1
      %s221 = smul.addr %s220, 2
      %s222 = smul.addr %s221, 4
      %s223 = scalar_lea.vmem %s0, %s222
      %p224 = pneg %p39
      %p225 = pneg %p36
      %p226 = pneg %p60
      %p227 = pneg %p57
      %p228 = pneg %p81
      %p229 = pneg %p78
      %p230 = pneg %p102
      %p231 = pneg %p99
      %p232 = pneg %p123
      %p233 = pneg %p120
      %p234 = pneg %p144
      %p235 = pneg %p141
      %p236 = pneg %p170
      %p237 = pneg %p167
      %p238 = scmp.lt.s32.totalorder %s18, 1
      %s239 = scalar_select %p238, %s18, 1
      %s240 = smul.addr %s239, 2
      %s241 = smul.addr %s240, 4
      %s242 = scalar_lea.vmem %s6, %s241
      %p243 = scmp.lt.s32.totalorder %s18, 1
      %s244 = scalar_select %p243, %s18, 1
      %s245 = smul.addr %s244, 2
      %s246 = smul.addr %s245, 4
      %s247 = scalar_lea.vmem %s0, %s246
      %p248 = scmp.lt.s32.totalorder %s18, 1
      %s249 = scalar_select %p248, %s18, 1
      %s250 = smul.addr %s249, 2
      %s251 = smul.addr %s250, 4
      %s252 = scalar_lea.vmem %s6, %s251
      %v253 = vld [vmem:[%s247] sm:$0xff]
      %v255 = vcombine.high %v253, %v253
      %vm257 = vcmask 1043456
      %v258 = vsel %vm257, %v253, 0.0
      %v259 = vsel %vm257, %v255, 0.0
      %260 = vxpose.xlu0.b32.start [1/16] %v258, 128
      %261 = vxpose.xlu0.b32.cont [2/16] 0.0, 128
      %262 = vxpose.xlu0.b32.cont [3/16] 0.0, 128
      %263 = vxpose.xlu0.b32.cont [4/16] 0.0, 128
      %264 = vxpose.xlu0.b32.cont [5/16] 0.0, 128
      %265 = vxpose.xlu0.b32.cont [6/16] 0.0, 128
      %266 = vxpose.xlu0.b32.cont [7/16] 0.0, 128
      %267 = vxpose.xlu0.b32.cont [8/16] 0.0, 128
      %268 = vxpose.xlu0.b32.cont [9/16] 0.0, 128
      %269 = vxpose.xlu0.b32.cont [10/16] 0.0, 128
      %270 = vxpose.xlu0.b32.cont [11/16] 0.0, 128
      %271 = vxpose.xlu0.b32.cont [12/16] 0.0, 128
      %272 = vxpose.xlu0.b32.cont [13/16] 0.0, 128
      %273 = vxpose.xlu0.b32.cont [14/16] 0.0, 128
      %274 = vxpose.xlu0.b32.cont [15/16] 0.0, 128
      %275 = vxpose.xlu0.b32.end [16/16] 0.0, 128
      %v276 = vpop.trf.xlu0
      %v277 = vpop.trf.xlu0
      %v278 = vpop.trf.xlu0
      %v279 = vpop.trf.xlu0
      %v280 = vpop.trf.xlu0
      %v281 = vpop.trf.xlu0
      %v282 = vpop.trf.xlu0
      %v283 = vpop.trf.xlu0
      %v284 = vpop.trf.xlu0
      %v285 = vpop.trf.xlu0
      %v286 = vpop.trf.xlu0
      %v287 = vpop.trf.xlu0
      %v288 = vpop.trf.xlu0
      %v289 = vpop.trf.xlu0
      %v290 = vpop.trf.xlu0
      %v291 = vpop.trf.xlu0
      %292 = vxpose.xlu0.b32.start [1/16] %v259, 128
      %293 = vxpose.xlu0.b32.cont [2/16] 0.0, 128
      %294 = vxpose.xlu0.b32.cont [3/16] 0.0, 128
      %295 = vxpose.xlu0.b32.cont [4/16] 0.0, 128
      %296 = vxpose.xlu0.b32.cont [5/16] 0.0, 128
      %297 = vxpose.xlu0.b32.cont [6/16] 0.0, 128
      %298 = vxpose.xlu0.b32.cont [7/16] 0.0, 128
      %299 = vxpose.xlu0.b32.cont [8/16] 0.0, 128
      %300 = vxpose.xlu0.b32.cont [9/16] 0.0, 128
      %301 = vxpose.xlu0.b32.cont [10/16] 0.0, 128
      %302 = vxpose.xlu0.b32.cont [11/16] 0.0, 128
      %303 = vxpose.xlu0.b32.cont [12/16] 0.0, 128
      %304 = vxpose.xlu0.b32.cont [13/16] 0.0, 128
      %305 = vxpose.xlu0.b32.cont [14/16] 0.0, 128
      %306 = vxpose.xlu0.b32.cont [15/16] 0.0, 128
      %307 = vxpose.xlu0.b32.end [16/16] 0.0, 128
      %v308 = vpop.trf.xlu0
      %v309 = vpop.trf.xlu0
      %v310 = vpop.trf.xlu0
      %v311 = vpop.trf.xlu0
      %v312 = vpop.trf.xlu0
      %v313 = vpop.trf.xlu0
      %v314 = vpop.trf.xlu0
      %v315 = vpop.trf.xlu0
      %v316 = vpop.trf.xlu0
      %v317 = vpop.trf.xlu0
      %v318 = vpop.trf.xlu0
      %v319 = vpop.trf.xlu0
      %v320 = vpop.trf.xlu0
      %v321 = vpop.trf.xlu0
      %v322 = vpop.trf.xlu0
      %v323 = vpop.trf.xlu0
      %v340 = vrot.slane %v278, 1
      %v341 = vrot.slane %v276, 1
      %v342 = vrot.slane %v280, 1
      %v343 = vrot.slane %v282, 1
      %v344 = vrot.slane %v284, 1
      %v345 = vrot.slane %v286, 1
      %v346 = vrot.slane %v288, 1
      %v347 = vrot.slane %v290, 1
      %v348 = vrot.slane %v308, 1
      %v349 = vrot.slane %v310, 1
      %v350 = vrot.slane %v312, 1
      %v351 = vrot.slane %v314, 1
      %v352 = vrot.slane %v316, 1
      %v353 = vrot.slane %v318, 1
      %v354 = vrot.slane %v320, 1
      %v355 = vrot.slane %v322, 1
      %vm388 = vcmask 1040384
      %v389 = vrot.slane %v278, 7
      %v390 = vrot.slane %v279, 7
      %v391 = vsel %vm388, %v389, %v390
      %v392 = vrot.slane %v276, 7
      %v393 = vrot.slane %v277, 7
      %v394 = vsel %vm388, %v392, %v393
      %v395 = vrot.slane %v280, 7
      %v396 = vrot.slane %v281, 7
      %v397 = vsel %vm388, %v395, %v396
      %v398 = vrot.slane %v282, 7
      %v399 = vrot.slane %v283, 7
      %v400 = vsel %vm388, %v398, %v399
      %v401 = vrot.slane %v284, 7
      %v402 = vrot.slane %v285, 7
      %v403 = vsel %vm388, %v401, %v402
      %v404 = vrot.slane %v286, 7
      %v405 = vrot.slane %v287, 7
      %v406 = vsel %vm388, %v404, %v405
      %v407 = vrot.slane %v288, 7
      %v408 = vrot.slane %v289, 7
      %v409 = vsel %vm388, %v407, %v408
      %v410 = vrot.slane %v290, 7
      %v411 = vrot.slane %v291, 7
      %v412 = vsel %vm388, %v410, %v411
      %v413 = vrot.slane %v308, 7
      %v414 = vrot.slane %v309, 7
      %v415 = vsel %vm388, %v413, %v414
      %v416 = vrot.slane %v310, 7
      %v417 = vrot.slane %v311, 7
      %v418 = vsel %vm388, %v416, %v417
      %v419 = vrot.slane %v312, 7
      %v420 = vrot.slane %v313, 7
      %v421 = vsel %vm388, %v419, %v420
      %v422 = vrot.slane %v314, 7
      %v423 = vrot.slane %v315, 7
      %v424 = vsel %vm388, %v422, %v423
      %v425 = vrot.slane %v316, 7
      %v426 = vrot.slane %v317, 7
      %v427 = vsel %vm388, %v425, %v426
      %v428 = vrot.slane %v318, 7
      %v429 = vrot.slane %v319, 7
      %v430 = vsel %vm388, %v428, %v429
      %v431 = vrot.slane %v320, 7
      %v432 = vrot.slane %v321, 7
      %v433 = vsel %vm388, %v431, %v432
      %v434 = vrot.slane %v322, 7
      %v435 = vrot.slane %v323, 7
      %v436 = vsel %vm388, %v434, %v435
      %v484 = vrot.slane %v279, 5
      %v485 = vrot.slane %v277, 5
      %v486 = vrot.slane %v281, 5
      %v487 = vrot.slane %v283, 5
      %v488 = vrot.slane %v285, 5
      %v489 = vrot.slane %v287, 5
      %v490 = vrot.slane %v289, 5
      %v491 = vrot.slane %v291, 5
      %v492 = vrot.slane %v309, 5
      %v493 = vrot.slane %v311, 5
      %v494 = vrot.slane %v313, 5
      %v495 = vrot.slane %v315, 5
      %v496 = vrot.slane %v317, 5
      %v497 = vrot.slane %v319, 5
      %v498 = vrot.slane %v321, 5
      %v499 = vrot.slane %v323, 5
      %v516 = vsel %vm388, %v340, %v389
      %v517 = vsel %vm388, %v341, %v392
      %v518 = vsel %vm388, %v342, %v395
      %v519 = vsel %vm388, %v343, %v398
      %v520 = vsel %vm388, %v344, %v401
      %v521 = vsel %vm388, %v345, %v404
      %v522 = vsel %vm388, %v346, %v407
      %v523 = vsel %vm388, %v347, %v410
      %v524 = vsel %vm388, %v348, %v413
      %v525 = vsel %vm388, %v349, %v416
      %v526 = vsel %vm388, %v350, %v419
      %v527 = vsel %vm388, %v351, %v422
      %v528 = vsel %vm388, %v352, %v425
      %v529 = vsel %vm388, %v353, %v428
      %v530 = vsel %vm388, %v354, %v431
      %v531 = vsel %vm388, %v355, %v434
      %v532 = vsel %vm388, %v390, %v484
      %v533 = vsel %vm388, %v393, %v485
      %v534 = vsel %vm388, %v396, %v486
      %v535 = vsel %vm388, %v399, %v487
      %v536 = vsel %vm388, %v402, %v488
      %v537 = vsel %vm388, %v405, %v489
      %v538 = vsel %vm388, %v408, %v490
      %v539 = vsel %vm388, %v411, %v491
      %v540 = vsel %vm388, %v414, %v492
      %v541 = vsel %vm388, %v417, %v493
      %v542 = vsel %vm388, %v420, %v494
      %v543 = vsel %vm388, %v423, %v495
      %v544 = vsel %vm388, %v426, %v496
      %v545 = vsel %vm388, %v429, %v497
      %v546 = vsel %vm388, %v432, %v498
      %v547 = vsel %vm388, %v435, %v499
      %vm578 = vcmask 1046528
      %v579 = vrot.slane %v516, 1
      %v580 = vrot.slane %v391, 1
      %v581 = vsel %vm578, %v579, %v580
      %v582 = vrot.slane %v532, 1
      %v583 = vsel %vm578, %v580, %v582
      %v584 = vrot.slane %v517, 1
      %v585 = vrot.slane %v394, 1
      %v586 = vsel %vm578, %v584, %v585
      %v587 = vrot.slane %v533, 1
      %v588 = vsel %vm578, %v585, %v587
      %v589 = vrot.slane %v518, 1
      %v590 = vrot.slane %v397, 1
      %v591 = vsel %vm578, %v589, %v590
      %v592 = vrot.slane %v534, 1
      %v593 = vsel %vm578, %v590, %v592
      %v594 = vrot.slane %v519, 1
      %v595 = vrot.slane %v400, 1
      %v596 = vsel %vm578, %v594, %v595
      %v597 = vrot.slane %v535, 1
      %v598 = vsel %vm578, %v595, %v597
      %v599 = vrot.slane %v520, 1
      %v600 = vrot.slane %v403, 1
      %v601 = vsel %vm578, %v599, %v600
      %v602 = vrot.slane %v536, 1
      %v603 = vsel %vm578, %v600, %v602
      %v604 = vrot.slane %v521, 1
      %v605 = vrot.slane %v406, 1
      %v606 = vsel %vm578, %v604, %v605
      %v607 = vrot.slane %v537, 1
      %v608 = vsel %vm578, %v605, %v607
      %v609 = vrot.slane %v522, 1
      %v610 = vrot.slane %v409, 1
      %v611 = vsel %vm578, %v609, %v610
      %v612 = vrot.slane %v538, 1
      %v613 = vsel %vm578, %v610, %v612
      %v614 = vrot.slane %v523, 1
      %v615 = vrot.slane %v412, 1
      %v616 = vsel %vm578, %v614, %v615
      %v617 = vrot.slane %v539, 1
      %v618 = vsel %vm578, %v615, %v617
      %v619 = vrot.slane %v524, 1
      %v620 = vrot.slane %v415, 1
      %v621 = vsel %vm578, %v619, %v620
      %v622 = vrot.slane %v540, 1
      %v623 = vsel %vm578, %v620, %v622
      %v624 = vrot.slane %v525, 1
      %v625 = vrot.slane %v418, 1
      %v626 = vsel %vm578, %v624, %v625
      %v627 = vrot.slane %v541, 1
      %v628 = vsel %vm578, %v625, %v627
      %v629 = vrot.slane %v526, 1
      %v630 = vrot.slane %v421, 1
      %v631 = vsel %vm578, %v629, %v630
      %v632 = vrot.slane %v542, 1
      %v633 = vsel %vm578, %v630, %v632
      %v634 = vrot.slane %v527, 1
      %v635 = vrot.slane %v424, 1
      %v636 = vsel %vm578, %v634, %v635
      %v637 = vrot.slane %v543, 1
      %v638 = vsel %vm578, %v635, %v637
      %v639 = vrot.slane %v528, 1
      %v640 = vrot.slane %v427, 1
      %v641 = vsel %vm578, %v639, %v640
      %v642 = vrot.slane %v544, 1
      %v643 = vsel %vm578, %v640, %v642
      %v644 = vrot.slane %v529, 1
      %v645 = vrot.slane %v430, 1
      %v646 = vsel %vm578, %v644, %v645
      %v647 = vrot.slane %v545, 1
      %v648 = vsel %vm578, %v645, %v647
      %v649 = vrot.slane %v530, 1
      %v650 = vrot.slane %v433, 1
      %v651 = vsel %vm578, %v649, %v650
      %v652 = vrot.slane %v546, 1
      %v653 = vsel %vm578, %v650, %v652
      %vm654 = vcmask 1045504
      %v655 = vrot.slane %v516, 2
      %v656 = vrot.slane %v391, 2
      %v657 = vsel %vm654, %v655, %v656
      %v658 = vrot.slane %v532, 2
      %v659 = vsel %vm654, %v656, %v658
      %v660 = vrot.slane %v517, 2
      %v661 = vrot.slane %v394, 2
      %v662 = vsel %vm654, %v660, %v661
      %v663 = vrot.slane %v533, 2
      %v664 = vsel %vm654, %v661, %v663
      %v665 = vrot.slane %v518, 2
      %v666 = vrot.slane %v397, 2
      %v667 = vsel %vm654, %v665, %v666
      %v668 = vrot.slane %v534, 2
      %v669 = vsel %vm654, %v666, %v668
      %v670 = vrot.slane %v519, 2
      %v671 = vrot.slane %v400, 2
      %v672 = vsel %vm654, %v670, %v671
      %v673 = vrot.slane %v535, 2
      %v674 = vsel %vm654, %v671, %v673
      %v675 = vrot.slane %v520, 2
      %v676 = vrot.slane %v403, 2
      %v677 = vsel %vm654, %v675, %v676
      %v678 = vrot.slane %v536, 2
      %v679 = vsel %vm654, %v676, %v678
      %v680 = vrot.slane %v521, 2
      %v681 = vrot.slane %v406, 2
      %v682 = vsel %vm654, %v680, %v681
      %v683 = vrot.slane %v537, 2
      %v684 = vsel %vm654, %v681, %v683
      %v685 = vrot.slane %v522, 2
      %v686 = vrot.slane %v409, 2
      %v687 = vsel %vm654, %v685, %v686
      %v688 = vrot.slane %v538, 2
      %v689 = vsel %vm654, %v686, %v688
      %v690 = vrot.slane %v523, 2
      %v691 = vrot.slane %v412, 2
      %v692 = vsel %vm654, %v690, %v691
      %v693 = vrot.slane %v539, 2
      %v694 = vsel %vm654, %v691, %v693
      %v695 = vrot.slane %v524, 2
      %v696 = vrot.slane %v415, 2
      %v697 = vsel %vm654, %v695, %v696
      %v698 = vrot.slane %v540, 2
      %v699 = vsel %vm654, %v696, %v698
      %v700 = vrot.slane %v525, 2
      %v701 = vrot.slane %v418, 2
      %v702 = vsel %vm654, %v700, %v701
      %v703 = vrot.slane %v541, 2
      %v704 = vsel %vm654, %v701, %v703
      %v705 = vrot.slane %v526, 2
      %v706 = vrot.slane %v421, 2
      %v707 = vsel %vm654, %v705, %v706
      %v708 = vrot.slane %v542, 2
      %v709 = vsel %vm654, %v706, %v708
      %v710 = vrot.slane %v527, 2
      %v711 = vrot.slane %v424, 2
      %v712 = vsel %vm654, %v710, %v711
      %v713 = vrot.slane %v543, 2
      %v714 = vsel %vm654, %v711, %v713
      %v715 = vrot.slane %v528, 2
      %v716 = vrot.slane %v427, 2
      %v717 = vsel %vm654, %v715, %v716
      %v718 = vrot.slane %v544, 2
      %v719 = vsel %vm654, %v716, %v718
      %v720 = vrot.slane %v529, 2
      %v721 = vrot.slane %v430, 2
      %v722 = vsel %vm654, %v720, %v721
      %v723 = vrot.slane %v545, 2
      %v724 = vsel %vm654, %v721, %v723
      %v725 = vrot.slane %v530, 2
      %v726 = vrot.slane %v433, 2
      %v727 = vsel %vm654, %v725, %v726
      %v728 = vrot.slane %v546, 2
      %v729 = vsel %vm654, %v726, %v728
      %v732 = vrot.slane %v531, 1
      %v733 = vrot.slane %v436, 1
      %v734 = vsel %vm578, %v732, %v733
      %v735 = vrot.slane %v547, 1
      %v736 = vsel %vm578, %v733, %v735
      %v737 = vrot.slane %v531, 2
      %v738 = vrot.slane %v436, 2
      %v739 = vsel %vm654, %v737, %v738
      %v740 = vrot.slane %v547, 2
      %v741 = vsel %vm654, %v738, %v740
      %742 = vrot.lane.b32.xlu0 %v581, 4
      %v743 = vpop.permute.xlu0 %742
      %744 = vrot.lane.b32.xlu0 %v583, 4
      %v745 = vpop.permute.xlu0 %744
      %746 = vrot.lane.b32.xlu0 %v586, 4
      %v747 = vpop.permute.xlu0 %746
      %748 = vrot.lane.b32.xlu0 %v588, 4
      %v749 = vpop.permute.xlu0 %748
      %750 = vrot.lane.b32.xlu0 %v591, 4
      %v751 = vpop.permute.xlu0 %750
      %752 = vrot.lane.b32.xlu0 %v593, 4
      %v753 = vpop.permute.xlu0 %752
      %754 = vrot.lane.b32.xlu0 %v596, 4
      %v755 = vpop.permute.xlu0 %754
      %756 = vrot.lane.b32.xlu0 %v598, 4
      %v757 = vpop.permute.xlu0 %756
      %758 = vrot.lane.b32.xlu0 %v601, 4
      %v759 = vpop.permute.xlu0 %758
      %760 = vrot.lane.b32.xlu0 %v603, 4
      %v761 = vpop.permute.xlu0 %760
      %762 = vrot.lane.b32.xlu0 %v606, 4
      %v763 = vpop.permute.xlu0 %762
      %764 = vrot.lane.b32.xlu0 %v608, 4
      %v765 = vpop.permute.xlu0 %764
      %766 = vrot.lane.b32.xlu0 %v611, 4
      %v767 = vpop.permute.xlu0 %766
      %768 = vrot.lane.b32.xlu0 %v613, 4
      %v769 = vpop.permute.xlu0 %768
      %770 = vrot.lane.b32.xlu0 %v616, 4
      %v771 = vpop.permute.xlu0 %770
      %772 = vrot.lane.b32.xlu0 %v618, 4
      %v773 = vpop.permute.xlu0 %772
      %774 = vrot.lane.b32.xlu0 %v621, 4
      %v775 = vpop.permute.xlu0 %774
      %776 = vrot.lane.b32.xlu0 %v623, 4
      %v777 = vpop.permute.xlu0 %776
      %778 = vrot.lane.b32.xlu0 %v626, 4
      %v779 = vpop.permute.xlu0 %778
      %780 = vrot.lane.b32.xlu0 %v628, 4
      %v781 = vpop.permute.xlu0 %780
      %782 = vrot.lane.b32.xlu0 %v631, 4
      %v783 = vpop.permute.xlu0 %782
      %784 = vrot.lane.b32.xlu0 %v633, 4
      %v785 = vpop.permute.xlu0 %784
      %786 = vrot.lane.b32.xlu0 %v636, 4
      %v787 = vpop.permute.xlu0 %786
      %788 = vrot.lane.b32.xlu0 %v638, 4
      %v789 = vpop.permute.xlu0 %788
      %790 = vrot.lane.b32.xlu0 %v641, 4
      %v791 = vpop.permute.xlu0 %790
      %792 = vrot.lane.b32.xlu0 %v643, 4
      %v793 = vpop.permute.xlu0 %792
      %794 = vrot.lane.b32.xlu0 %v646, 4
      %v795 = vpop.permute.xlu0 %794
      %796 = vrot.lane.b32.xlu0 %v648, 4
      %v797 = vpop.permute.xlu0 %796
      %798 = vrot.lane.b32.xlu0 %v651, 4
      %v799 = vpop.permute.xlu0 %798
      %800 = vrot.lane.b32.xlu0 %v653, 4
      %v801 = vpop.permute.xlu0 %800
      %832 = vrot.lane.b32.xlu0 %v657, 8
      %v833 = vpop.permute.xlu0 %832
      %834 = vrot.lane.b32.xlu0 %v659, 8
      %v835 = vpop.permute.xlu0 %834
      %836 = vrot.lane.b32.xlu0 %v662, 8
      %v837 = vpop.permute.xlu0 %836
      %838 = vrot.lane.b32.xlu0 %v664, 8
      %v839 = vpop.permute.xlu0 %838
      %840 = vrot.lane.b32.xlu0 %v667, 8
      %v841 = vpop.permute.xlu0 %840
      %842 = vrot.lane.b32.xlu0 %v669, 8
      %v843 = vpop.permute.xlu0 %842
      %844 = vrot.lane.b32.xlu0 %v672, 8
      %v845 = vpop.permute.xlu0 %844
      %846 = vrot.lane.b32.xlu0 %v674, 8
      %v847 = vpop.permute.xlu0 %846
      %848 = vrot.lane.b32.xlu0 %v677, 8
      %v849 = vpop.permute.xlu0 %848
      %850 = vrot.lane.b32.xlu0 %v679, 8
      %v851 = vpop.permute.xlu0 %850
      %852 = vrot.lane.b32.xlu0 %v682, 8
      %v853 = vpop.permute.xlu0 %852
      %854 = vrot.lane.b32.xlu0 %v684, 8
      %v855 = vpop.permute.xlu0 %854
      %856 = vrot.lane.b32.xlu0 %v687, 8
      %v857 = vpop.permute.xlu0 %856
      %858 = vrot.lane.b32.xlu0 %v689, 8
      %v859 = vpop.permute.xlu0 %858
      %860 = vrot.lane.b32.xlu0 %v692, 8
      %v861 = vpop.permute.xlu0 %860
      %862 = vrot.lane.b32.xlu0 %v694, 8
      %v863 = vpop.permute.xlu0 %862
      %864 = vrot.lane.b32.xlu0 %v697, 8
      %v865 = vpop.permute.xlu0 %864
      %866 = vrot.lane.b32.xlu0 %v699, 8
      %v867 = vpop.permute.xlu0 %866
      %868 = vrot.lane.b32.xlu0 %v702, 8
      %v869 = vpop.permute.xlu0 %868
      %870 = vrot.lane.b32.xlu0 %v704, 8
      %v871 = vpop.permute.xlu0 %870
      %872 = vrot.lane.b32.xlu0 %v707, 8
      %v873 = vpop.permute.xlu0 %872
      %874 = vrot.lane.b32.xlu0 %v709, 8
      %v875 = vpop.permute.xlu0 %874
      %876 = vrot.lane.b32.xlu0 %v712, 8
      %v877 = vpop.permute.xlu0 %876
      %878 = vrot.lane.b32.xlu0 %v714, 8
      %v879 = vpop.permute.xlu0 %878
      %880 = vrot.lane.b32.xlu0 %v717, 8
      %v881 = vpop.permute.xlu0 %880
      %882 = vrot.lane.b32.xlu0 %v719, 8
      %v883 = vpop.permute.xlu0 %882
      %884 = vrot.lane.b32.xlu0 %v722, 8
      %v885 = vpop.permute.xlu0 %884
      %886 = vrot.lane.b32.xlu0 %v724, 8
      %v887 = vpop.permute.xlu0 %886
      %888 = vrot.lane.b32.xlu0 %v727, 8
      %v889 = vpop.permute.xlu0 %888
      %890 = vrot.lane.b32.xlu0 %v729, 8
      %v891 = vpop.permute.xlu0 %890
      %922 = vrot.lane.b32.xlu0 %v517, 12
      %v923 = vpop.permute.xlu0 %922
      %924 = vrot.lane.b32.xlu0 %v394, 12
      %v925 = vpop.permute.xlu0 %924
      %926 = vrot.lane.b32.xlu0 %v516, 12
      %v927 = vpop.permute.xlu0 %926
      %928 = vrot.lane.b32.xlu0 %v391, 12
      %v929 = vpop.permute.xlu0 %928
      %930 = vrot.lane.b32.xlu0 %v518, 12
      %v931 = vpop.permute.xlu0 %930
      %932 = vrot.lane.b32.xlu0 %v397, 12
      %v933 = vpop.permute.xlu0 %932
      %934 = vrot.lane.b32.xlu0 %v519, 12
      %v935 = vpop.permute.xlu0 %934
      %936 = vrot.lane.b32.xlu0 %v400, 12
      %v937 = vpop.permute.xlu0 %936
      %938 = vrot.lane.b32.xlu0 %v520, 12
      %v939 = vpop.permute.xlu0 %938
      %940 = vrot.lane.b32.xlu0 %v403, 12
      %v941 = vpop.permute.xlu0 %940
      %942 = vrot.lane.b32.xlu0 %v521, 12
      %v943 = vpop.permute.xlu0 %942
      %944 = vrot.lane.b32.xlu0 %v406, 12
      %v945 = vpop.permute.xlu0 %944
      %946 = vrot.lane.b32.xlu0 %v522, 12
      %v947 = vpop.permute.xlu0 %946
      %948 = vrot.lane.b32.xlu0 %v409, 12
      %v949 = vpop.permute.xlu0 %948
      %950 = vrot.lane.b32.xlu0 %v523, 12
      %v951 = vpop.permute.xlu0 %950
      %952 = vrot.lane.b32.xlu0 %v412, 12
      %v953 = vpop.permute.xlu0 %952
      %954 = vrot.lane.b32.xlu0 %v524, 12
      %v955 = vpop.permute.xlu0 %954
      %956 = vrot.lane.b32.xlu0 %v415, 12
      %v957 = vpop.permute.xlu0 %956
      %958 = vrot.lane.b32.xlu0 %v525, 12
      %v959 = vpop.permute.xlu0 %958
      %960 = vrot.lane.b32.xlu0 %v418, 12
      %v961 = vpop.permute.xlu0 %960
      %962 = vrot.lane.b32.xlu0 %v526, 12
      %v963 = vpop.permute.xlu0 %962
      %964 = vrot.lane.b32.xlu0 %v421, 12
      %v965 = vpop.permute.xlu0 %964
      %966 = vrot.lane.b32.xlu0 %v527, 12
      %v967 = vpop.permute.xlu0 %966
      %968 = vrot.lane.b32.xlu0 %v424, 12
      %v969 = vpop.permute.xlu0 %968
      %970 = vrot.lane.b32.xlu0 %v528, 12
      %v971 = vpop.permute.xlu0 %970
      %972 = vrot.lane.b32.xlu0 %v427, 12
      %v973 = vpop.permute.xlu0 %972
      %974 = vrot.lane.b32.xlu0 %v529, 12
      %v975 = vpop.permute.xlu0 %974
      %976 = vrot.lane.b32.xlu0 %v430, 12
      %v977 = vpop.permute.xlu0 %976
      %978 = vrot.lane.b32.xlu0 %v530, 12
      %v979 = vpop.permute.xlu0 %978
      %980 = vrot.lane.b32.xlu0 %v433, 12
      %v981 = vpop.permute.xlu0 %980
      %982 = vrot.lane.b32.xlu0 %v531, 12
      %v983 = vpop.permute.xlu0 %982
      %984 = vrot.lane.b32.xlu0 %v436, 12
      %v985 = vpop.permute.xlu0 %984
      %1018 = vrot.lane.b32.xlu0 %v586, 16
      %v1019 = vpop.permute.xlu0 %1018
      %1020 = vrot.lane.b32.xlu0 %v588, 16
      %v1021 = vpop.permute.xlu0 %1020
      %1022 = vrot.lane.b32.xlu0 %v581, 16
      %v1023 = vpop.permute.xlu0 %1022
      %1024 = vrot.lane.b32.xlu0 %v583, 16
      %v1025 = vpop.permute.xlu0 %1024
      %1026 = vrot.lane.b32.xlu0 %v591, 16
      %v1027 = vpop.permute.xlu0 %1026
      %1028 = vrot.lane.b32.xlu0 %v593, 16
      %v1029 = vpop.permute.xlu0 %1028
      %1030 = vrot.lane.b32.xlu0 %v596, 16
      %v1031 = vpop.permute.xlu0 %1030
      %1032 = vrot.lane.b32.xlu0 %v598, 16
      %v1033 = vpop.permute.xlu0 %1032
      %1034 = vrot.lane.b32.xlu0 %v601, 16
      %v1035 = vpop.permute.xlu0 %1034
      %1036 = vrot.lane.b32.xlu0 %v603, 16
      %v1037 = vpop.permute.xlu0 %1036
      %1038 = vrot.lane.b32.xlu0 %v606, 16
      %v1039 = vpop.permute.xlu0 %1038
      %1040 = vrot.lane.b32.xlu0 %v608, 16
      %v1041 = vpop.permute.xlu0 %1040
      %1042 = vrot.lane.b32.xlu0 %v611, 16
      %v1043 = vpop.permute.xlu0 %1042
      %1044 = vrot.lane.b32.xlu0 %v613, 16
      %v1045 = vpop.permute.xlu0 %1044
      %1046 = vrot.lane.b32.xlu0 %v616, 16
      %v1047 = vpop.permute.xlu0 %1046
      %1048 = vrot.lane.b32.xlu0 %v618, 16
      %v1049 = vpop.permute.xlu0 %1048
      %1050 = vrot.lane.b32.xlu0 %v621, 16
      %v1051 = vpop.permute.xlu0 %1050
      %1052 = vrot.lane.b32.xlu0 %v623, 16
      %v1053 = vpop.permute.xlu0 %1052
      %1054 = vrot.lane.b32.xlu0 %v626, 16
      %v1055 = vpop.permute.xlu0 %1054
      %1056 = vrot.lane.b32.xlu0 %v628, 16
      %v1057 = vpop.permute.xlu0 %1056
      %1058 = vrot.lane.b32.xlu0 %v631, 16
      %v1059 = vpop.permute.xlu0 %1058
      %1060 = vrot.lane.b32.xlu0 %v633, 16
      %v1061 = vpop.permute.xlu0 %1060
      %1062 = vrot.lane.b32.xlu0 %v636, 16
      %v1063 = vpop.permute.xlu0 %1062
      %1064 = vrot.lane.b32.xlu0 %v638, 16
      %v1065 = vpop.permute.xlu0 %1064
      %1066 = vrot.lane.b32.xlu0 %v641, 16
      %v1067 = vpop.permute.xlu0 %1066
      %1068 = vrot.lane.b32.xlu0 %v643, 16
      %v1069 = vpop.permute.xlu0 %1068
      %1070 = vrot.lane.b32.xlu0 %v646, 16
      %v1071 = vpop.permute.xlu0 %1070
      %1072 = vrot.lane.b32.xlu0 %v648, 16
      %v1073 = vpop.permute.xlu0 %1072
      %1074 = vrot.lane.b32.xlu0 %v651, 16
      %v1075 = vpop.permute.xlu0 %1074
      %1076 = vrot.lane.b32.xlu0 %v653, 16
      %v1077 = vpop.permute.xlu0 %1076
      %1078 = vrot.lane.b32.xlu0 %v734, 16
      %v1079 = vpop.permute.xlu0 %1078
      %1080 = vrot.lane.b32.xlu0 %v736, 16
      %v1081 = vpop.permute.xlu0 %1080
      %1114 = vrot.lane.b32.xlu0 %v662, 20
      %v1115 = vpop.permute.xlu0 %1114
      %1116 = vrot.lane.b32.xlu0 %v664, 20
      %v1117 = vpop.permute.xlu0 %1116
      %1118 = vrot.lane.b32.xlu0 %v657, 20
      %v1119 = vpop.permute.xlu0 %1118
      %1120 = vrot.lane.b32.xlu0 %v659, 20
      %v1121 = vpop.permute.xlu0 %1120
      %1122 = vrot.lane.b32.xlu0 %v667, 20
      %v1123 = vpop.permute.xlu0 %1122
      %1124 = vrot.lane.b32.xlu0 %v669, 20
      %v1125 = vpop.permute.xlu0 %1124
      %1126 = vrot.lane.b32.xlu0 %v672, 20
      %v1127 = vpop.permute.xlu0 %1126
      %1128 = vrot.lane.b32.xlu0 %v674, 20
      %v1129 = vpop.permute.xlu0 %1128
      %1130 = vrot.lane.b32.xlu0 %v677, 20
      %v1131 = vpop.permute.xlu0 %1130
      %1132 = vrot.lane.b32.xlu0 %v679, 20
      %v1133 = vpop.permute.xlu0 %1132
      %1134 = vrot.lane.b32.xlu0 %v682, 20
      %v1135 = vpop.permute.xlu0 %1134
      %1136 = vrot.lane.b32.xlu0 %v684, 20
      %v1137 = vpop.permute.xlu0 %1136
      %1138 = vrot.lane.b32.xlu0 %v687, 20
      %v1139 = vpop.permute.xlu0 %1138
      %1140 = vrot.lane.b32.xlu0 %v689, 20
      %v1141 = vpop.permute.xlu0 %1140
      %1142 = vrot.lane.b32.xlu0 %v692, 20
      %v1143 = vpop.permute.xlu0 %1142
      %1144 = vrot.lane.b32.xlu0 %v694, 20
      %v1145 = vpop.permute.xlu0 %1144
      %1146 = vrot.lane.b32.xlu0 %v697, 20
      %v1147 = vpop.permute.xlu0 %1146
      %1148 = vrot.lane.b32.xlu0 %v699, 20
      %v1149 = vpop.permute.xlu0 %1148
      %1150 = vrot.lane.b32.xlu0 %v702, 20
      %v1151 = vpop.permute.xlu0 %1150
      %1152 = vrot.lane.b32.xlu0 %v704, 20
      %v1153 = vpop.permute.xlu0 %1152
      %1154 = vrot.lane.b32.xlu0 %v707, 20
      %v1155 = vpop.permute.xlu0 %1154
      %1156 = vrot.lane.b32.xlu0 %v709, 20
      %v1157 = vpop.permute.xlu0 %1156
      %1158 = vrot.lane.b32.xlu0 %v712, 20
      %v1159 = vpop.permute.xlu0 %1158
      %1160 = vrot.lane.b32.xlu0 %v714, 20
      %v1161 = vpop.permute.xlu0 %1160
      %1162 = vrot.lane.b32.xlu0 %v717, 20
      %v1163 = vpop.permute.xlu0 %1162
      %1164 = vrot.lane.b32.xlu0 %v719, 20
      %v1165 = vpop.permute.xlu0 %1164
      %1166 = vrot.lane.b32.xlu0 %v722, 20
      %v1167 = vpop.permute.xlu0 %1166
      %1168 = vrot.lane.b32.xlu0 %v724, 20
      %v1169 = vpop.permute.xlu0 %1168
      %1170 = vrot.lane.b32.xlu0 %v727, 20
      %v1171 = vpop.permute.xlu0 %1170
      %1172 = vrot.lane.b32.xlu0 %v729, 20
      %v1173 = vpop.permute.xlu0 %1172
      %1174 = vrot.lane.b32.xlu0 %v739, 20
      %v1175 = vpop.permute.xlu0 %1174
      %1176 = vrot.lane.b32.xlu0 %v741, 20
      %v1177 = vpop.permute.xlu0 %1176
      %1210 = vrot.lane.b32.xlu0 %v516, 24
      %v1211 = vpop.permute.xlu0 %1210
      %1212 = vrot.lane.b32.xlu0 %v391, 24
      %v1213 = vpop.permute.xlu0 %1212
      %1214 = vrot.lane.b32.xlu0 %v518, 24
      %v1215 = vpop.permute.xlu0 %1214
      %1216 = vrot.lane.b32.xlu0 %v397, 24
      %v1217 = vpop.permute.xlu0 %1216
      %1218 = vrot.lane.b32.xlu0 %v519, 24
      %v1219 = vpop.permute.xlu0 %1218
      %1220 = vrot.lane.b32.xlu0 %v400, 24
      %v1221 = vpop.permute.xlu0 %1220
      %1222 = vrot.lane.b32.xlu0 %v520, 24
      %v1223 = vpop.permute.xlu0 %1222
      %1224 = vrot.lane.b32.xlu0 %v403, 24
      %v1225 = vpop.permute.xlu0 %1224
      %1226 = vrot.lane.b32.xlu0 %v521, 24
      %v1227 = vpop.permute.xlu0 %1226
      %1228 = vrot.lane.b32.xlu0 %v406, 24
      %v1229 = vpop.permute.xlu0 %1228
      %1230 = vrot.lane.b32.xlu0 %v522, 24
      %v1231 = vpop.permute.xlu0 %1230
      %1232 = vrot.lane.b32.xlu0 %v409, 24
      %v1233 = vpop.permute.xlu0 %1232
      %1234 = vrot.lane.b32.xlu0 %v523, 24
      %v1235 = vpop.permute.xlu0 %1234
      %1236 = vrot.lane.b32.xlu0 %v412, 24
      %v1237 = vpop.permute.xlu0 %1236
      %1238 = vrot.lane.b32.xlu0 %v524, 24
      %v1239 = vpop.permute.xlu0 %1238
      %1240 = vrot.lane.b32.xlu0 %v415, 24
      %v1241 = vpop.permute.xlu0 %1240
      %1242 = vrot.lane.b32.xlu0 %v525, 24
      %v1243 = vpop.permute.xlu0 %1242
      %1244 = vrot.lane.b32.xlu0 %v418, 24
      %v1245 = vpop.permute.xlu0 %1244
      %1246 = vrot.lane.b32.xlu0 %v526, 24
      %v1247 = vpop.permute.xlu0 %1246
      %1248 = vrot.lane.b32.xlu0 %v421, 24
      %v1249 = vpop.permute.xlu0 %1248
      %1250 = vrot.lane.b32.xlu0 %v527, 24
      %v1251 = vpop.permute.xlu0 %1250
      %1252 = vrot.lane.b32.xlu0 %v424, 24
      %v1253 = vpop.permute.xlu0 %1252
      %1254 = vrot.lane.b32.xlu0 %v528, 24
      %v1255 = vpop.permute.xlu0 %1254
      %1256 = vrot.lane.b32.xlu0 %v427, 24
      %v1257 = vpop.permute.xlu0 %1256
      %1258 = vrot.lane.b32.xlu0 %v529, 24
      %v1259 = vpop.permute.xlu0 %1258
      %1260 = vrot.lane.b32.xlu0 %v430, 24
      %v1261 = vpop.permute.xlu0 %1260
      %1262 = vrot.lane.b32.xlu0 %v530, 24
      %v1263 = vpop.permute.xlu0 %1262
      %1264 = vrot.lane.b32.xlu0 %v433, 24
      %v1265 = vpop.permute.xlu0 %1264
      %1266 = vrot.lane.b32.xlu0 %v531, 24
      %v1267 = vpop.permute.xlu0 %1266
      %1268 = vrot.lane.b32.xlu0 %v436, 24
      %v1269 = vpop.permute.xlu0 %1268
      %1300 = vrot.lane.b32.xlu0 %v581, 28
      %v1301 = vpop.permute.xlu0 %1300
      %1302 = vrot.lane.b32.xlu0 %v583, 28
      %v1303 = vpop.permute.xlu0 %1302
      %1304 = vrot.lane.b32.xlu0 %v591, 28
      %v1305 = vpop.permute.xlu0 %1304
      %1306 = vrot.lane.b32.xlu0 %v593, 28
      %v1307 = vpop.permute.xlu0 %1306
      %1308 = vrot.lane.b32.xlu0 %v596, 28
      %v1309 = vpop.permute.xlu0 %1308
      %1310 = vrot.lane.b32.xlu0 %v598, 28
      %v1311 = vpop.permute.xlu0 %1310
      %1312 = vrot.lane.b32.xlu0 %v601, 28
      %v1313 = vpop.permute.xlu0 %1312
      %1314 = vrot.lane.b32.xlu0 %v603, 28
      %v1315 = vpop.permute.xlu0 %1314
      %1316 = vrot.lane.b32.xlu0 %v606, 28
      %v1317 = vpop.permute.xlu0 %1316
      %1318 = vrot.lane.b32.xlu0 %v608, 28
      %v1319 = vpop.permute.xlu0 %1318
      %1320 = vrot.lane.b32.xlu0 %v611, 28
      %v1321 = vpop.permute.xlu0 %1320
      %1322 = vrot.lane.b32.xlu0 %v613, 28
      %v1323 = vpop.permute.xlu0 %1322
      %1324 = vrot.lane.b32.xlu0 %v616, 28
      %v1325 = vpop.permute.xlu0 %1324
      %1326 = vrot.lane.b32.xlu0 %v618, 28
      %v1327 = vpop.permute.xlu0 %1326
      %1328 = vrot.lane.b32.xlu0 %v621, 28
      %v1329 = vpop.permute.xlu0 %1328
      %1330 = vrot.lane.b32.xlu0 %v623, 28
      %v1331 = vpop.permute.xlu0 %1330
      %1332 = vrot.lane.b32.xlu0 %v626, 28
      %v1333 = vpop.permute.xlu0 %1332
      %1334 = vrot.lane.b32.xlu0 %v628, 28
      %v1335 = vpop.permute.xlu0 %1334
      %1336 = vrot.lane.b32.xlu0 %v631, 28
      %v1337 = vpop.permute.xlu0 %1336
      %1338 = vrot.lane.b32.xlu0 %v633, 28
      %v1339 = vpop.permute.xlu0 %1338
      %1340 = vrot.lane.b32.xlu0 %v636, 28
      %v1341 = vpop.permute.xlu0 %1340
      %1342 = vrot.lane.b32.xlu0 %v638, 28
      %v1343 = vpop.permute.xlu0 %1342
      %1344 = vrot.lane.b32.xlu0 %v641, 28
      %v1345 = vpop.permute.xlu0 %1344
      %1346 = vrot.lane.b32.xlu0 %v643, 28
      %v1347 = vpop.permute.xlu0 %1346
      %1348 = vrot.lane.b32.xlu0 %v646, 28
      %v1349 = vpop.permute.xlu0 %1348
      %1350 = vrot.lane.b32.xlu0 %v648, 28
      %v1351 = vpop.permute.xlu0 %1350
      %1352 = vrot.lane.b32.xlu0 %v651, 28
      %v1353 = vpop.permute.xlu0 %1352
      %1354 = vrot.lane.b32.xlu0 %v653, 28
      %v1355 = vpop.permute.xlu0 %1354
      %1356 = vrot.lane.b32.xlu0 %v734, 28
      %v1357 = vpop.permute.xlu0 %1356
      %1358 = vrot.lane.b32.xlu0 %v736, 28
      %v1359 = vpop.permute.xlu0 %1358
      %1390 = vrot.lane.b32.xlu0 %v657, 32
      %v1391 = vpop.permute.xlu0 %1390
      %1392 = vrot.lane.b32.xlu0 %v659, 32
      %v1393 = vpop.permute.xlu0 %1392
      %1394 = vrot.lane.b32.xlu0 %v667, 32
      %v1395 = vpop.permute.xlu0 %1394
      %1396 = vrot.lane.b32.xlu0 %v669, 32
      %v1397 = vpop.permute.xlu0 %1396
      %1398 = vrot.lane.b32.xlu0 %v672, 32
      %v1399 = vpop.permute.xlu0 %1398
      %1400 = vrot.lane.b32.xlu0 %v674, 32
      %v1401 = vpop.permute.xlu0 %1400
      %1402 = vrot.lane.b32.xlu0 %v677, 32
      %v1403 = vpop.permute.xlu0 %1402
      %1404 = vrot.lane.b32.xlu0 %v679, 32
      %v1405 = vpop.permute.xlu0 %1404
      %1406 = vrot.lane.b32.xlu0 %v682, 32
      %v1407 = vpop.permute.xlu0 %1406
      %1408 = vrot.lane.b32.xlu0 %v684, 32
      %v1409 = vpop.permute.xlu0 %1408
      %1410 = vrot.lane.b32.xlu0 %v687, 32
      %v1411 = vpop.permute.xlu0 %1410
      %1412 = vrot.lane.b32.xlu0 %v689, 32
      %v1413 = vpop.permute.xlu0 %1412
      %1414 = vrot.lane.b32.xlu0 %v692, 32
      %v1415 = vpop.permute.xlu0 %1414
      %1416 = vrot.lane.b32.xlu0 %v694, 32
      %v1417 = vpop.permute.xlu0 %1416
      %1418 = vrot.lane.b32.xlu0 %v697, 32
      %v1419 = vpop.permute.xlu0 %1418
      %1420 = vrot.lane.b32.xlu0 %v699, 32
      %v1421 = vpop.permute.xlu0 %1420
      %1422 = vrot.lane.b32.xlu0 %v702, 32
      %v1423 = vpop.permute.xlu0 %1422
      %1424 = vrot.lane.b32.xlu0 %v704, 32
      %v1425 = vpop.permute.xlu0 %1424
      %1426 = vrot.lane.b32.xlu0 %v707, 32
      %v1427 = vpop.permute.xlu0 %1426
      %1428 = vrot.lane.b32.xlu0 %v709, 32
      %v1429 = vpop.permute.xlu0 %1428
      %1430 = vrot.lane.b32.xlu0 %v712, 32
      %v1431 = vpop.permute.xlu0 %1430
      %1432 = vrot.lane.b32.xlu0 %v714, 32
      %v1433 = vpop.permute.xlu0 %1432
      %1434 = vrot.lane.b32.xlu0 %v717, 32
      %v1435 = vpop.permute.xlu0 %1434
      %1436 = vrot.lane.b32.xlu0 %v719, 32
      %v1437 = vpop.permute.xlu0 %1436
      %1438 = vrot.lane.b32.xlu0 %v722, 32
      %v1439 = vpop.permute.xlu0 %1438
      %1440 = vrot.lane.b32.xlu0 %v724, 32
      %v1441 = vpop.permute.xlu0 %1440
      %1442 = vrot.lane.b32.xlu0 %v727, 32
      %v1443 = vpop.permute.xlu0 %1442
      %1444 = vrot.lane.b32.xlu0 %v729, 32
      %v1445 = vpop.permute.xlu0 %1444
      %1446 = vrot.lane.b32.xlu0 %v739, 32
      %v1447 = vpop.permute.xlu0 %1446
      %1448 = vrot.lane.b32.xlu0 %v741, 32
      %v1449 = vpop.permute.xlu0 %1448
      %vm1480 = vcmask 31744
      %v1481 = vsel %vm1480, %v516, %v743
      %v1482 = vsel %vm1480, %v391, %v745
      %v1483 = vsel %vm1480, %v517, %v747
      %v1484 = vsel %vm1480, %v394, %v749
      %v1485 = vsel %vm1480, %v518, %v751
      %v1486 = vsel %vm1480, %v397, %v753
      %v1487 = vsel %vm1480, %v519, %v755
      %v1488 = vsel %vm1480, %v400, %v757
      %v1489 = vsel %vm1480, %v520, %v759
      %v1490 = vsel %vm1480, %v403, %v761
      %v1491 = vsel %vm1480, %v521, %v763
      %v1492 = vsel %vm1480, %v406, %v765
      %v1493 = vsel %vm1480, %v522, %v767
      %v1494 = vsel %vm1480, %v409, %v769
      %v1495 = vsel %vm1480, %v523, %v771
      %v1496 = vsel %vm1480, %v412, %v773
      %v1497 = vsel %vm1480, %v524, %v775
      %v1498 = vsel %vm1480, %v415, %v777
      %v1499 = vsel %vm1480, %v525, %v779
      %v1500 = vsel %vm1480, %v418, %v781
      %v1501 = vsel %vm1480, %v526, %v783
      %v1502 = vsel %vm1480, %v421, %v785
      %v1503 = vsel %vm1480, %v527, %v787
      %v1504 = vsel %vm1480, %v424, %v789
      %v1505 = vsel %vm1480, %v528, %v791
      %v1506 = vsel %vm1480, %v427, %v793
      %v1507 = vsel %vm1480, %v529, %v795
      %v1508 = vsel %vm1480, %v430, %v797
      %v1509 = vsel %vm1480, %v530, %v799
      %v1510 = vsel %vm1480, %v433, %v801
      %vm1511 = vcmask 64512
      %v1512 = vsel %vm1511, %v1481, %v833
      %v1513 = vsel %vm1511, %v1482, %v835
      %v1514 = vsel %vm1511, %v1483, %v837
      %v1515 = vsel %vm1511, %v1484, %v839
      %v1516 = vsel %vm1511, %v1485, %v841
      %v1517 = vsel %vm1511, %v1486, %v843
      %v1518 = vsel %vm1511, %v1487, %v845
      %v1519 = vsel %vm1511, %v1488, %v847
      %v1520 = vsel %vm1511, %v1489, %v849
      %v1521 = vsel %vm1511, %v1490, %v851
      %v1522 = vsel %vm1511, %v1491, %v853
      %v1523 = vsel %vm1511, %v1492, %v855
      %v1524 = vsel %vm1511, %v1493, %v857
      %v1525 = vsel %vm1511, %v1494, %v859
      %v1526 = vsel %vm1511, %v1495, %v861
      %v1527 = vsel %vm1511, %v1496, %v863
      %v1528 = vsel %vm1511, %v1497, %v865
      %v1529 = vsel %vm1511, %v1498, %v867
      %v1530 = vsel %vm1511, %v1499, %v869
      %v1531 = vsel %vm1511, %v1500, %v871
      %v1532 = vsel %vm1511, %v1501, %v873
      %v1533 = vsel %vm1511, %v1502, %v875
      %v1534 = vsel %vm1511, %v1503, %v877
      %v1535 = vsel %vm1511, %v1504, %v879
      %v1536 = vsel %vm1511, %v1505, %v881
      %v1537 = vsel %vm1511, %v1506, %v883
      %v1538 = vsel %vm1511, %v1507, %v885
      %v1539 = vsel %vm1511, %v1508, %v887
      %v1540 = vsel %vm1511, %v1509, %v889
      %v1541 = vsel %vm1511, %v1510, %v891
      %vm1542 = vcmask 97280
      %v1543 = vsel %vm1542, %v1512, %v923
      %v1544 = vsel %vm1542, %v1513, %v925
      %v1545 = vsel %vm1542, %v1514, %v927
      %v1546 = vsel %vm1542, %v1515, %v929
      %v1547 = vsel %vm1542, %v1512, %v931
      %v1548 = vsel %vm1542, %v1513, %v933
      %v1549 = vsel %vm1542, %v1516, %v935
      %v1550 = vsel %vm1542, %v1517, %v937
      %v1551 = vsel %vm1542, %v1518, %v939
      %v1552 = vsel %vm1542, %v1519, %v941
      %v1553 = vsel %vm1542, %v1520, %v943
      %v1554 = vsel %vm1542, %v1521, %v945
      %v1555 = vsel %vm1542, %v1522, %v947
      %v1556 = vsel %vm1542, %v1523, %v949
      %v1557 = vsel %vm1542, %v1524, %v951
      %v1558 = vsel %vm1542, %v1525, %v953
      %v1559 = vsel %vm1542, %v1526, %v955
      %v1560 = vsel %vm1542, %v1527, %v957
      %v1561 = vsel %vm1542, %v1528, %v959
      %v1562 = vsel %vm1542, %v1529, %v961
      %v1563 = vsel %vm1542, %v1530, %v963
      %v1564 = vsel %vm1542, %v1531, %v965
      %v1565 = vsel %vm1542, %v1532, %v967
      %v1566 = vsel %vm1542, %v1533, %v969
      %v1567 = vsel %vm1542, %v1534, %v971
      %v1568 = vsel %vm1542, %v1535, %v973
      %v1569 = vsel %vm1542, %v1536, %v975
      %v1570 = vsel %vm1542, %v1537, %v977
      %v1571 = vsel %vm1542, %v1538, %v979
      %v1572 = vsel %vm1542, %v1539, %v981
      %v1573 = vsel %vm1542, %v1540, %v983
      %v1574 = vsel %vm1542, %v1541, %v985
      %vm1575 = vcmask 130048
      %v1576 = vsel %vm1575, %v1543, %v1019
      %v1577 = vsel %vm1575, %v1544, %v1021
      %v1578 = vsel %vm1575, %v1545, %v1023
      %v1579 = vsel %vm1575, %v1546, %v1025
      %v1580 = vsel %vm1575, %v1547, %v1027
      %v1581 = vsel %vm1575, %v1548, %v1029
      %v1582 = vsel %vm1575, %v1549, %v1031
      %v1583 = vsel %vm1575, %v1550, %v1033
      %v1584 = vsel %vm1575, %v1551, %v1035
      %v1585 = vsel %vm1575, %v1552, %v1037
      %v1586 = vsel %vm1575, %v1553, %v1039
      %v1587 = vsel %vm1575, %v1554, %v1041
      %v1588 = vsel %vm1575, %v1555, %v1043
      %v1589 = vsel %vm1575, %v1556, %v1045
      %v1590 = vsel %vm1575, %v1557, %v1047
      %v1591 = vsel %vm1575, %v1558, %v1049
      %v1592 = vsel %vm1575, %v1559, %v1051
      %v1593 = vsel %vm1575, %v1560, %v1053
      %v1594 = vsel %vm1575, %v1561, %v1055
      %v1595 = vsel %vm1575, %v1562, %v1057
      %v1596 = vsel %vm1575, %v1563, %v1059
      %v1597 = vsel %vm1575, %v1564, %v1061
      %v1598 = vsel %vm1575, %v1565, %v1063
      %v1599 = vsel %vm1575, %v1566, %v1065
      %v1600 = vsel %vm1575, %v1567, %v1067
      %v1601 = vsel %vm1575, %v1568, %v1069
      %v1602 = vsel %vm1575, %v1569, %v1071
      %v1603 = vsel %vm1575, %v1570, %v1073
      %v1604 = vsel %vm1575, %v1571, %v1075
      %v1605 = vsel %vm1575, %v1572, %v1077
      %v1606 = vsel %vm1575, %v1573, %v1079
      %v1607 = vsel %vm1575, %v1574, %v1081
      %vm1608 = vcmask 162816
      %v1609 = vsel %vm1608, %v1576, %v1115
      %v1610 = vsel %vm1608, %v1577, %v1117
      %v1611 = vsel %vm1608, %v1578, %v1119
      %v1612 = vsel %vm1608, %v1579, %v1121
      %v1613 = vsel %vm1608, %v1580, %v1123
      %v1614 = vsel %vm1608, %v1581, %v1125
      %v1615 = vsel %vm1608, %v1582, %v1127
      %v1616 = vsel %vm1608, %v1583, %v1129
      %v1617 = vsel %vm1608, %v1584, %v1131
      %v1618 = vsel %vm1608, %v1585, %v1133
      %v1619 = vsel %vm1608, %v1586, %v1135
      %v1620 = vsel %vm1608, %v1587, %v1137
      %v1621 = vsel %vm1608, %v1588, %v1139
      %v1622 = vsel %vm1608, %v1589, %v1141
      %v1623 = vsel %vm1608, %v1590, %v1143
      %v1624 = vsel %vm1608, %v1591, %v1145
      %v1625 = vsel %vm1608, %v1592, %v1147
      %v1626 = vsel %vm1608, %v1593, %v1149
      %v1627 = vsel %vm1608, %v1594, %v1151
      %v1628 = vsel %vm1608, %v1595, %v1153
      %v1629 = vsel %vm1608, %v1596, %v1155
      %v1630 = vsel %vm1608, %v1597, %v1157
      %v1631 = vsel %vm1608, %v1598, %v1159
      %v1632 = vsel %vm1608, %v1599, %v1161
      %v1633 = vsel %vm1608, %v1600, %v1163
      %v1634 = vsel %vm1608, %v1601, %v1165
      %v1635 = vsel %vm1608, %v1602, %v1167
      %v1636 = vsel %vm1608, %v1603, %v1169
      %v1637 = vsel %vm1608, %v1604, %v1171
      %v1638 = vsel %vm1608, %v1605, %v1173
      %v1639 = vsel %vm1608, %v1606, %v1175
      %v1640 = vsel %vm1608, %v1607, %v1177
      %vm1641 = vcmask 195584
      %v1642 = vsel %vm1641, %v1609, %v1211
      %v1643 = vsel %vm1641, %v1610, %v1213
      %v1644 = vsel %vm1641, %v1611, %v1215
      %v1645 = vsel %vm1641, %v1612, %v1217
      %v1646 = vsel %vm1641, %v1613, %v1219
      %v1647 = vsel %vm1641, %v1614, %v1221
      %v1648 = vsel %vm1641, %v1615, %v1223
      %v1649 = vsel %vm1641, %v1616, %v1225
      %v1650 = vsel %vm1641, %v1617, %v1227
      %v1651 = vsel %vm1641, %v1618, %v1229
      %v1652 = vsel %vm1641, %v1619, %v1231
      %v1653 = vsel %vm1641, %v1620, %v1233
      %v1654 = vsel %vm1641, %v1621, %v1235
      %v1655 = vsel %vm1641, %v1622, %v1237
      %v1656 = vsel %vm1641, %v1623, %v1239
      %v1657 = vsel %vm1641, %v1624, %v1241
      %v1658 = vsel %vm1641, %v1625, %v1243
      %v1659 = vsel %vm1641, %v1626, %v1245
      %v1660 = vsel %vm1641, %v1627, %v1247
      %v1661 = vsel %vm1641, %v1628, %v1249
      %v1662 = vsel %vm1641, %v1629, %v1251
      %v1663 = vsel %vm1641, %v1630, %v1253
      %v1664 = vsel %vm1641, %v1631, %v1255
      %v1665 = vsel %vm1641, %v1632, %v1257
      %v1666 = vsel %vm1641, %v1633, %v1259
      %v1667 = vsel %vm1641, %v1634, %v1261
      %v1668 = vsel %vm1641, %v1635, %v1263
      %v1669 = vsel %vm1641, %v1636, %v1265
      %v1670 = vsel %vm1641, %v1637, %v1267
      %v1671 = vsel %vm1641, %v1638, %v1269
      %v1672 = vsel %vm1641, %v1639, %v1263
      %v1673 = vsel %vm1641, %v1640, %v1265
      %vm1674 = vcmask 228352
      %v1675 = vsel %vm1674, %v1642, %v1301
      %v1676 = vsel %vm1674, %v1643, %v1303
      %v1677 = vsel %vm1674, %v1644, %v1305
      %v1678 = vsel %vm1674, %v1645, %v1307
      %v1679 = vsel %vm1674, %v1646, %v1309
      %v1680 = vsel %vm1674, %v1647, %v1311
      %v1681 = vsel %vm1674, %v1648, %v1313
      %v1682 = vsel %vm1674, %v1649, %v1315
      %v1683 = vsel %vm1674, %v1650, %v1317
      %v1684 = vsel %vm1674, %v1651, %v1319
      %v1685 = vsel %vm1674, %v1652, %v1321
      %v1686 = vsel %vm1674, %v1653, %v1323
      %v1687 = vsel %vm1674, %v1654, %v1325
      %v1688 = vsel %vm1674, %v1655, %v1327
      %v1689 = vsel %vm1674, %v1656, %v1329
      %v1690 = vsel %vm1674, %v1657, %v1331
      %v1691 = vsel %vm1674, %v1658, %v1333
      %v1692 = vsel %vm1674, %v1659, %v1335
      %v1693 = vsel %vm1674, %v1660, %v1337
      %v1694 = vsel %vm1674, %v1661, %v1339
      %v1695 = vsel %vm1674, %v1662, %v1341
      %v1696 = vsel %vm1674, %v1663, %v1343
      %v1697 = vsel %vm1674, %v1664, %v1345
      %v1698 = vsel %vm1674, %v1665, %v1347
      %v1699 = vsel %vm1674, %v1666, %v1349
      %v1700 = vsel %vm1674, %v1667, %v1351
      %v1701 = vsel %vm1674, %v1668, %v1353
      %v1702 = vsel %vm1674, %v1669, %v1355
      %v1703 = vsel %vm1674, %v1670, %v1357
      %v1704 = vsel %vm1674, %v1671, %v1359
      %v1705 = vsel %vm1674, %v1672, %v1353
      %v1706 = vsel %vm1674, %v1673, %v1355
      %vm1707 = vcmask 261120
      %v1708 = vsel %vm1707, %v1675, %v1391
      %v1709 = vsel %vm1707, %v1676, %v1393
      %v1710 = vsel %vm1707, %v1677, %v1395
      %v1711 = vsel %vm1707, %v1678, %v1397
      %v1712 = vsel %vm1707, %v1679, %v1399
      %v1713 = vsel %vm1707, %v1680, %v1401
      %v1714 = vsel %vm1707, %v1681, %v1403
      %v1715 = vsel %vm1707, %v1682, %v1405
      %v1716 = vsel %vm1707, %v1683, %v1407
      %v1717 = vsel %vm1707, %v1684, %v1409
      %v1718 = vsel %vm1707, %v1685, %v1411
      %v1719 = vsel %vm1707, %v1686, %v1413
      %v1720 = vsel %vm1707, %v1687, %v1415
      %v1721 = vsel %vm1707, %v1688, %v1417
      %v1722 = vsel %vm1707, %v1689, %v1419
      %v1723 = vsel %vm1707, %v1690, %v1421
      %v1724 = vsel %vm1707, %v1691, %v1423
      %v1725 = vsel %vm1707, %v1692, %v1425
      %v1726 = vsel %vm1707, %v1693, %v1427
      %v1727 = vsel %vm1707, %v1694, %v1429
      %v1728 = vsel %vm1707, %v1695, %v1431
      %v1729 = vsel %vm1707, %v1696, %v1433
      %v1730 = vsel %vm1707, %v1697, %v1435
      %v1731 = vsel %vm1707, %v1698, %v1437
      %v1732 = vsel %vm1707, %v1699, %v1439
      %v1733 = vsel %vm1707, %v1700, %v1441
      %v1734 = vsel %vm1707, %v1701, %v1443
      %v1735 = vsel %vm1707, %v1702, %v1445
      %v1736 = vsel %vm1707, %v1703, %v1447
      %v1737 = vsel %vm1707, %v1704, %v1449
      %v1738 = vsel %vm1707, %v1705, %v1443
      %v1739 = vsel %vm1707, %v1706, %v1445
      %v1740 = vld [vmem:[%s1] sm:$0xff]
      %v1741 = vld [vmem:[%s1 + $0x8] sm:$0xff]
      %v1742 = vld [vmem:[%s1 + $0x10] sm:$0xff]
      %v1743 = vld [vmem:[%s1 + $0x18] sm:$0xff]
      %v1744 = vld [vmem:[%s1 + $0x20] sm:$0xf]
      %v1745 = vld [vmem:[%s2] sm:$0x1]
      %v1747 = vlaneseq
      %v1748 = vshrl.u32 %v1747, 7
      %v1749 = vsub.s32 0, %v1748
      %v1750 = vrot.slane %v1745, %v1749
      %vm1752 = vcmask 293888
      %v1754 = vsel %vm1752, %v1708, 0
      %v1757 = vsel %vm1752, %v1709, 0
      %v1760 = vsel %vm1752, %v1710, 0
      %v1763 = vsel %vm1752, %v1711, 0
      %v1766 = vsel %vm1752, %v1712, 0
      %v1769 = vsel %vm1752, %v1713, 0
      %v1772 = vsel %vm1752, %v1714, 0
      %v1775 = vsel %vm1752, %v1715, 0
      %v1778 = vsel %vm1752, %v1716, 0
      %v1781 = vsel %vm1752, %v1717, 0
      %v1784 = vsel %vm1752, %v1718, 0
      %v1787 = vsel %vm1752, %v1719, 0
      %v1790 = vsel %vm1752, %v1720, 0
      %v1793 = vsel %vm1752, %v1721, 0
      %v1796 = vsel %vm1752, %v1722, 0
      %v1799 = vsel %vm1752, %v1723, 0
      %v1802 = vsel %vm1752, %v1724, 0
      %v1805 = vsel %vm1752, %v1725, 0
      %v1808 = vsel %vm1752, %v1726, 0
      %v1811 = vsel %vm1752, %v1727, 0
      %v1814 = vsel %vm1752, %v1728, 0
      %v1817 = vsel %vm1752, %v1729, 0
      %v1820 = vsel %vm1752, %v1730, 0
      %v1823 = vsel %vm1752, %v1731, 0
      %v1826 = vsel %vm1752, %v1732, 0
      %v1829 = vsel %vm1752, %v1733, 0
      %v1832 = vsel %vm1752, %v1734, 0
      %v1835 = vsel %vm1752, %v1735, 0
      %v1838 = vsel %vm1752, %v1736, 0
      %v1841 = vsel %vm1752, %v1737, 0
      %v1844 = vsel %vm1752, %v1738, 0
      %v1847 = vsel %vm1752, %v1739, 0
      %v1850 = vsel %vm257, %v1744, 0
      %1852 = vmatprep.subr.mxu0 0.0
      %1853 = vmatpush1.msra.mxu0 %v1740
      %1854 = vmatprep.subr.mxu0 0.0
      %1855 = vmatpush1.msra.mxu0 %v1741
      %1856 = vmatprep.subr.mxu0 0.0
      %1857 = vmatpush1.msra.mxu0 %v1742
      %1858 = vmatprep.subr.mxu0 0.0
      %1859 = vmatpush1.msra.mxu0 %v1743
      %1860 = vmatprep.subr.mxu0 0.0
      %1861 = vmatpush1.msra.mxu0 %v1850
      %1862 = vmatprep.subr.mxu0 0.0
      %1863 = vmatpush1.msra.mxu0 0.0
      %1864 = vmatprep.subr.mxu0 0.0
      %1865 = vmatpush1.msra.mxu0 0.0
      %1866 = vmatprep.subr.mxu0 0.0
      %1867 = vmatpush1.msra.mxu0 0.0
      %1868 = vmatprep.subr.mxu0 0.0
      %1869 = vmatpush1.msra.mxu0 0.0
      %1870 = vmatprep.subr.mxu0 0.0
      %1871 = vmatpush1.msra.mxu0 0.0
      %1872 = vmatprep.subr.mxu0 0.0
      %1873 = vmatpush1.msra.mxu0 0.0
      %1874 = vmatprep.subr.mxu0 0.0
      %1875 = vmatpush1.msra.mxu0 0.0
      %1876 = vmatprep.subr.mxu0 0.0
      %1877 = vmatpush1.msra.mxu0 0.0
      %1878 = vmatprep.subr.mxu0 0.0
      %1879 = vmatpush1.msra.mxu0 0.0
      %1880 = vmatprep.subr.mxu0 0.0
      %1881 = vmatpush1.msra.mxu0 0.0
      %1882 = vmatprep.subr.mxu0 0.0
      %1883 = vmatpush1.msra.mxu0 0.0
      %1884 = vmatprep.subr.mxu0 0.0
      %1885 = vmatpush1.msra.mxu0 0.0
      %1886 = vmatprep.subr.mxu0 0.0
      %1887 = vmatpush1.msra.mxu0 0.0
      %1888 = vmatprep.subr.mxu0 0.0
      %1889 = vmatpush1.msra.mxu0 0.0
      %1890 = vmatprep.subr.mxu0 0.0
      %1891 = vmatpush1.msra.mxu0 0.0
      %1892 = vmatprep.subr.mxu0 0.0
      %1893 = vmatpush1.msra.mxu0 0.0
      %1894 = vmatprep.subr.mxu0 0.0
      %1895 = vmatpush1.msra.mxu0 0.0
      %1896 = vmatprep.subr.mxu0 0.0
      %1897 = vmatpush1.msra.mxu0 0.0
      %1898 = vmatprep.subr.mxu0 0.0
      %1899 = vmatpush1.msra.mxu0 0.0
      %1900 = vmatprep.subr.mxu0 0.0
      %1901 = vmatpush1.msra.mxu0 0.0
      %1902 = vmatprep.subr.mxu0 0.0
      %1903 = vmatpush1.msra.mxu0 0.0
      %1904 = vmatprep.subr.mxu0 0.0
      %1905 = vmatpush1.msra.mxu0 0.0
      %1906 = vmatprep.subr.mxu0 0.0
      %1907 = vmatpush1.msra.mxu0 0.0
      %1908 = vmatprep.subr.mxu0 0.0
      %1909 = vmatpush1.msra.mxu0 0.0
      %1910 = vmatprep.subr.mxu0 0.0
      %1911 = vmatpush1.msra.mxu0 0.0
      %1912 = vmatprep.subr.mxu0 0.0
      %1913 = vmatpush1.msra.mxu0 0.0
      %1914 = vmatprep.subr.mxu0 0.0
      %1915 = vmatpush1.msra.mxu0 0.0
      %1916 = vmatprep.mubr.f32.mxu0 0.0
      %1917 = vmatmul.mubr.f32.gmra.mrb[0].mxu0 %v1754
      %v1918 = vpop.f32.mrb[0].mxu0
      %v1919 = vadd.f32 %v1750, %v1918
      %v1920 = vpop.f32.mrb[0].mxu0
      %1921 = vmatprep.mubr.f32.mxu0 0.0
      %1922 = vmatmul.mubr.f32.gmra.mrb[0].mxu0 %v1757
      %v1923 = vpop.f32.mrb[0].mxu0
      %v1924 = vadd.f32 %v1750, %v1923
      %v1925 = vpop.f32.mrb[0].mxu0
      %1926 = vmatprep.mubr.f32.mxu0 0.0
      %1927 = vmatmul.mubr.f32.gmra.mrb[0].mxu0 %v1760
      %v1928 = vpop.f32.mrb[0].mxu0
      %v1929 = vadd.f32 %v1750, %v1928
      %v1930 = vpop.f32.mrb[0].mxu0
      %1931 = vmatprep.mubr.f32.mxu0 0.0
      %1932 = vmatmul.mubr.f32.gmra.mrb[0].mxu0 %v1763
      %v1933 = vpop.f32.mrb[0].mxu0
      %v1934 = vadd.f32 %v1750, %v1933
      %v1935 = vpop.f32.mrb[0].mxu0
      %1936 = vmatprep.mubr.f32.mxu0 0.0
      %1937 = vmatmul.mubr.f32.gmra.mrb[0].mxu0 %v1766
      %v1938 = vpop.f32.mrb[0].mxu0
      %v1939 = vadd.f32 %v1750, %v1938
      %v1940 = vpop.f32.mrb[0].mxu0
      %1941 = vmatprep.mubr.f32.mxu0 0.0
      %1942 = vmatmul.mubr.f32.gmra.mrb[0].mxu0 %v1769
      %v1943 = vpop.f32.mrb[0].mxu0
      %v1944 = vadd.f32 %v1750, %v1943
      %v1945 = vpop.f32.mrb[0].mxu0
      %1946 = vmatprep.mubr.f32.mxu0 0.0
      %1947 = vmatmul.mubr.f32.gmra.mrb[0].mxu0 %v1772
      %v1948 = vpop.f32.mrb[0].mxu0
      %v1949 = vadd.f32 %v1750, %v1948
      %v1950 = vpop.f32.mrb[0].mxu0
      %1951 = vmatprep.mubr.f32.mxu0 0.0
      %1952 = vmatmul.mubr.f32.gmra.mrb[0].mxu0 %v1775
      %v1953 = vpop.f32.mrb[0].mxu0
      %v1954 = vadd.f32 %v1750, %v1953
      %v1955 = vpop.f32.mrb[0].mxu0
      %1956 = vmatprep.mubr.f32.mxu0 0.0
      %1957 = vmatmul.mubr.f32.gmra.mrb[0].mxu0 %v1778
      %v1958 = vpop.f32.mrb[0].mxu0
      %v1959 = vadd.f32 %v1750, %v1958
      %v1960 = vpop.f32.mrb[0].mxu0
      %1961 = vmatprep.mubr.f32.mxu0 0.0
      %1962 = vmatmul.mubr.f32.gmra.mrb[0].mxu0 %v1781
      %v1963 = vpop.f32.mrb[0].mxu0
      %v1964 = vadd.f32 %v1750, %v1963
      %v1965 = vpop.f32.mrb[0].mxu0
      %1966 = vmatprep.mubr.f32.mxu0 0.0
      %1967 = vmatmul.mubr.f32.gmra.mrb[0].mxu0 %v1784
      %v1968 = vpop.f32.mrb[0].mxu0
      %v1969 = vadd.f32 %v1750, %v1968
      %v1970 = vpop.f32.mrb[0].mxu0
      %1971 = vmatprep.mubr.f32.mxu0 0.0
      %1972 = vmatmul.mubr.f32.gmra.mrb[0].mxu0 %v1787
      %v1973 = vpop.f32.mrb[0].mxu0
      %v1974 = vadd.f32 %v1750, %v1973
      %v1975 = vpop.f32.mrb[0].mxu0
      %1976 = vmatprep.mubr.f32.mxu0 0.0
      %1977 = vmatmul.mubr.f32.gmra.mrb[0].mxu0 %v1790
      %v1978 = vpop.f32.mrb[0].mxu0
      %v1979 = vadd.f32 %v1750, %v1978
      %v1980 = vpop.f32.mrb[0].mxu0
      %1981 = vmatprep.mubr.f32.mxu0 0.0
      %1982 = vmatmul.mubr.f32.gmra.mrb[0].mxu0 %v1793
      %v1983 = vpop.f32.mrb[0].mxu0
      %v1984 = vadd.f32 %v1750, %v1983
      %v1985 = vpop.f32.mrb[0].mxu0
      %1986 = vmatprep.mubr.f32.mxu0 0.0
      %1987 = vmatmul.mubr.f32.gmra.mrb[0].mxu0 %v1796
      %v1988 = vpop.f32.mrb[0].mxu0
      %v1989 = vadd.f32 %v1750, %v1988
      %v1990 = vpop.f32.mrb[0].mxu0
      %1991 = vmatprep.mubr.f32.mxu0 0.0
      %1992 = vmatmul.mubr.f32.gmra.mrb[0].mxu0 %v1799
      %v1993 = vpop.f32.mrb[0].mxu0
      %v1994 = vadd.f32 %v1750, %v1993
      %v1995 = vpop.f32.mrb[0].mxu0
      %1996 = vmatprep.mubr.f32.mxu0 0.0
      %1997 = vmatmul.mubr.f32.gmra.mrb[0].mxu0 %v1802
      %v1998 = vpop.f32.mrb[0].mxu0
      %v1999 = vadd.f32 %v1750, %v1998
      %v2000 = vpop.f32.mrb[0].mxu0
      %2001 = vmatprep.mubr.f32.mxu0 0.0
      %2002 = vmatmul.mubr.f32.gmra.mrb[0].mxu0 %v1805
      %v2003 = vpop.f32.mrb[0].mxu0
      %v2004 = vadd.f32 %v1750, %v2003
      %v2005 = vpop.f32.mrb[0].mxu0
      %2006 = vmatprep.mubr.f32.mxu0 0.0
      %2007 = vmatmul.mubr.f32.gmra.mrb[0].mxu0 %v1808
      %v2008 = vpop.f32.mrb[0].mxu0
      %v2009 = vadd.f32 %v1750, %v2008
      %v2010 = vpop.f32.mrb[0].mxu0
      %2011 = vmatprep.mubr.f32.mxu0 0.0
      %2012 = vmatmul.mubr.f32.gmra.mrb[0].mxu0 %v1811
      %v2013 = vpop.f32.mrb[0].mxu0
      %v2014 = vadd.f32 %v1750, %v2013
      %v2015 = vpop.f32.mrb[0].mxu0
      %2016 = vmatprep.mubr.f32.mxu0 0.0
      %2017 = vmatmul.mubr.f32.gmra.mrb[0].mxu0 %v1814
      %v2018 = vpop.f32.mrb[0].mxu0
      %v2019 = vadd.f32 %v1750, %v2018
      %v2020 = vpop.f32.mrb[0].mxu0
      %2021 = vmatprep.mubr.f32.mxu0 0.0
      %2022 = vmatmul.mubr.f32.gmra.mrb[0].mxu0 %v1817
      %v2023 = vpop.f32.mrb[0].mxu0
      %v2024 = vadd.f32 %v1750, %v2023
      %v2025 = vpop.f32.mrb[0].mxu0
      %2026 = vmatprep.mubr.f32.mxu0 0.0
      %2027 = vmatmul.mubr.f32.gmra.mrb[0].mxu0 %v1820
      %v2028 = vpop.f32.mrb[0].mxu0
      %v2029 = vadd.f32 %v1750, %v2028
      %v2030 = vpop.f32.mrb[0].mxu0
      %2031 = vmatprep.mubr.f32.mxu0 0.0
      %2032 = vmatmul.mubr.f32.gmra.mrb[0].mxu0 %v1823
      %v2033 = vpop.f32.mrb[0].mxu0
      %v2034 = vadd.f32 %v1750, %v2033
      %v2035 = vpop.f32.mrb[0].mxu0
      %2036 = vmatprep.mubr.f32.mxu0 0.0
      %2037 = vmatmul.mubr.f32.gmra.mrb[0].mxu0 %v1826
      %v2038 = vpop.f32.mrb[0].mxu0
      %v2039 = vadd.f32 %v1750, %v2038
      %v2040 = vpop.f32.mrb[0].mxu0
      %2041 = vmatprep.mubr.f32.mxu0 0.0
      %2042 = vmatmul.mubr.f32.gmra.mrb[0].mxu0 %v1829
      %v2043 = vpop.f32.mrb[0].mxu0
      %v2044 = vadd.f32 %v1750, %v2043
      %v2045 = vpop.f32.mrb[0].mxu0
      %2046 = vmatprep.mubr.f32.mxu0 0.0
      %2047 = vmatmul.mubr.f32.gmra.mrb[0].mxu0 %v1832
      %v2048 = vpop.f32.mrb[0].mxu0
      %v2049 = vadd.f32 %v1750, %v2048
      %v2050 = vpop.f32.mrb[0].mxu0
      %2051 = vmatprep.mubr.f32.mxu0 0.0
      %2052 = vmatmul.mubr.f32.gmra.mrb[0].mxu0 %v1835
      %v2053 = vpop.f32.mrb[0].mxu0
      %v2054 = vadd.f32 %v1750, %v2053
      %v2055 = vpop.f32.mrb[0].mxu0
      %2056 = vmatprep.mubr.f32.mxu0 0.0
      %2057 = vmatmul.mubr.f32.gmra.mrb[0].mxu0 %v1838
      %v2058 = vpop.f32.mrb[0].mxu0
      %v2059 = vadd.f32 %v1750, %v2058
      %v2060 = vpop.f32.mrb[0].mxu0
      %2061 = vmatprep.mubr.f32.mxu0 0.0
      %2062 = vmatmul.mubr.f32.gmra.mrb[0].mxu0 %v1841
      %v2063 = vpop.f32.mrb[0].mxu0
      %v2064 = vadd.f32 %v1750, %v2063
      %v2065 = vpop.f32.mrb[0].mxu0
      %2066 = vmatprep.mubr.f32.mxu0 0.0
      %2067 = vmatmul.mubr.f32.gmra.mrb[0].mxu0 %v1844
      %v2068 = vpop.f32.mrb[0].mxu0
      %v2069 = vadd.f32 %v1750, %v2068
      %v2070 = vpop.f32.mrb[0].mxu0
      %2071 = vmatprep.mubr.f32.mxu0 0.0
      %2072 = vmatmul.mubr.f32.gmra.mrb[0].mxu0 %v1847
      %v2073 = vpop.f32.mrb[0].mxu0
      %v2074 = vadd.f32 %v1750, %v2073
      %v2075 = vpop.f32.mrb[0].mxu0
      %2076 = vdwg.mxu0
      %s2077 = sld [smem:[#allocation2]]
      %vm2078 = vcmp.ge.f32.partialorder %v1919, 0.0
      %vm2079 = vcmp.ge.f32.partialorder %v1924, 0.0
      %vm2080 = vcmp.ge.f32.partialorder %v1929, 0.0
      %vm2081 = vcmp.ge.f32.partialorder %v1934, 0.0
      %vm2082 = vcmp.ge.f32.partialorder %v1939, 0.0
      %vm2083 = vcmp.ge.f32.partialorder %v1944, 0.0
      %vm2084 = vcmp.ge.f32.partialorder %v1949, 0.0
      %vm2085 = vcmp.ge.f32.partialorder %v1954, 0.0
      %vm2086 = vcmp.ge.f32.partialorder %v1959, 0.0
      %vm2087 = vcmp.ge.f32.partialorder %v1964, 0.0
      %vm2088 = vcmp.ge.f32.partialorder %v1969, 0.0
      %vm2089 = vcmp.ge.f32.partialorder %v1974, 0.0
      %vm2090 = vcmp.ge.f32.partialorder %v1979, 0.0
      %vm2091 = vcmp.ge.f32.partialorder %v1984, 0.0
      %vm2092 = vcmp.ge.f32.partialorder %v1989, 0.0
      %vm2093 = vcmp.ge.f32.partialorder %v1994, 0.0
      %vm2094 = vcmp.ge.f32.partialorder %v1999, 0.0
      %vm2095 = vcmp.ge.f32.partialorder %v2004, 0.0
      %vm2096 = vcmp.ge.f32.partialorder %v2009, 0.0
      %vm2097 = vcmp.ge.f32.partialorder %v2014, 0.0
      %vm2098 = vcmp.ge.f32.partialorder %v2019, 0.0
      %vm2099 = vcmp.ge.f32.partialorder %v2024, 0.0
      %vm2100 = vcmp.ge.f32.partialorder %v2029, 0.0
      %vm2101 = vcmp.ge.f32.partialorder %v2034, 0.0
      %vm2102 = vcmp.ge.f32.partialorder %v2039, 0.0
      %vm2103 = vcmp.ge.f32.partialorder %v2044, 0.0
      %vm2104 = vcmp.ge.f32.partialorder %v2049, 0.0
      %vm2105 = vcmp.ge.f32.partialorder %v2054, 0.0
      %vm2106 = vcmp.ge.f32.partialorder %v2059, 0.0
      %vm2107 = vcmp.ge.f32.partialorder %v2064, 0.0
      %vm2108 = vcmp.ge.f32.partialorder %v2069, 0.0
      %vm2109 = vcmp.ge.f32.partialorder %v2074, 0.0
      %v2110 = vstv %s2077
      %v2111 = vmul.f32 %v2110, %v1919
      %v2112 = vmul.f32 %v2110, %v1924
      %v2113 = vmul.f32 %v2110, %v1929
      %v2114 = vmul.f32 %v2110, %v1934
      %v2115 = vmul.f32 %v2110, %v1939
      %v2116 = vmul.f32 %v2110, %v1944
      %v2117 = vmul.f32 %v2110, %v1949
      %v2118 = vmul.f32 %v2110, %v1954
      %v2119 = vmul.f32 %v2110, %v1959
      %v2120 = vmul.f32 %v2110, %v1964
      %v2121 = vmul.f32 %v2110, %v1969
      %v2122 = vmul.f32 %v2110, %v1974
      %v2123 = vmul.f32 %v2110, %v1979
      %v2124 = vmul.f32 %v2110, %v1984
      %v2125 = vmul.f32 %v2110, %v1989
      %v2126 = vmul.f32 %v2110, %v1994
      %v2127 = vmul.f32 %v2110, %v1999
      %v2128 = vmul.f32 %v2110, %v2004
      %v2129 = vmul.f32 %v2110, %v2009
      %v2130 = vmul.f32 %v2110, %v2014
      %v2131 = vmul.f32 %v2110, %v2019
      %v2132 = vmul.f32 %v2110, %v2024
      %v2133 = vmul.f32 %v2110, %v2029
      %v2134 = vmul.f32 %v2110, %v2034
      %v2135 = vmul.f32 %v2110, %v2039
      %v2136 = vmul.f32 %v2110, %v2044
      %v2137 = vmul.f32 %v2110, %v2049
      %v2138 = vmul.f32 %v2110, %v2054
      %v2139 = vmul.f32 %v2110, %v2059
      %v2140 = vmul.f32 %v2110, %v2064
      %v2141 = vmul.f32 %v2110, %v2069
      %v2142 = vmul.f32 %v2110, %v2074
      %v2143 = vsel %vm2078, %v1919, %v2111
      %v2144 = vsel %vm2079, %v1924, %v2112
      %v2145 = vsel %vm2080, %v1929, %v2113
      %v2146 = vsel %vm2081, %v1934, %v2114
      %v2147 = vsel %vm2082, %v1939, %v2115
      %v2148 = vsel %vm2083, %v1944, %v2116
      %v2149 = vsel %vm2084, %v1949, %v2117
      %v2150 = vsel %vm2085, %v1954, %v2118
      %v2151 = vsel %vm2086, %v1959, %v2119
      %v2152 = vsel %vm2087, %v1964, %v2120
      %v2153 = vsel %vm2088, %v1969, %v2121
      %v2154 = vsel %vm2089, %v1974, %v2122
      %v2155 = vsel %vm2090, %v1979, %v2123
      %v2156 = vsel %vm2091, %v1984, %v2124
      %v2157 = vsel %vm2092, %v1989, %v2125
      %v2158 = vsel %vm2093, %v1994, %v2126
      %v2159 = vsel %vm2094, %v1999, %v2127
      %v2160 = vsel %vm2095, %v2004, %v2128
      %v2161 = vsel %vm2096, %v2009, %v2129
      %v2162 = vsel %vm2097, %v2014, %v2130
      %v2163 = vsel %vm2098, %v2019, %v2131
      %v2164 = vsel %vm2099, %v2024, %v2132
      %v2165 = vsel %vm2100, %v2029, %v2133
      %v2166 = vsel %vm2101, %v2034, %v2134
      %v2167 = vsel %vm2102, %v2039, %v2135
      %v2168 = vsel %vm2103, %v2044, %v2136
      %v2169 = vsel %vm2104, %v2049, %v2137
      %v2170 = vsel %vm2105, %v2054, %v2138
      %v2171 = vsel %vm2106, %v2059, %v2139
      %v2172 = vsel %vm2107, %v2064, %v2140
      %v2173 = vsel %vm2108, %v2069, %v2141
      %v2174 = vsel %vm2109, %v2074, %v2142
      %v2191 = vrot.slane %v2145, 1
      %v2192 = vrot.slane %v2143, 1
      %v2193 = vrot.slane %v2147, 1
      %v2194 = vrot.slane %v2149, 1
      %v2195 = vrot.slane %v2151, 1
      %v2196 = vrot.slane %v2153, 1
      %v2197 = vrot.slane %v2155, 1
      %v2198 = vrot.slane %v2157, 1
      %v2199 = vrot.slane %v2159, 1
      %v2200 = vrot.slane %v2161, 1
      %v2201 = vrot.slane %v2163, 1
      %v2202 = vrot.slane %v2165, 1
      %v2203 = vrot.slane %v2167, 1
      %v2204 = vrot.slane %v2169, 1
      %v2205 = vrot.slane %v2171, 1
      %v2206 = vrot.slane %v2173, 1
      %v2239 = vrot.slane %v2145, 7
      %v2240 = vrot.slane %v2146, 7
      %v2241 = vsel %vm388, %v2239, %v2240
      %v2242 = vrot.slane %v2143, 7
      %v2243 = vrot.slane %v2144, 7
      %v2244 = vsel %vm388, %v2242, %v2243
      %v2245 = vrot.slane %v2147, 7
      %v2246 = vrot.slane %v2148, 7
      %v2247 = vsel %vm388, %v2245, %v2246
      %v2248 = vrot.slane %v2149, 7
      %v2249 = vrot.slane %v2150, 7
      %v2250 = vsel %vm388, %v2248, %v2249
      %v2251 = vrot.slane %v2151, 7
      %v2252 = vrot.slane %v2152, 7
      %v2253 = vsel %vm388, %v2251, %v2252
      %v2254 = vrot.slane %v2153, 7
      %v2255 = vrot.slane %v2154, 7
      %v2256 = vsel %vm388, %v2254, %v2255
      %v2257 = vrot.slane %v2155, 7
      %v2258 = vrot.slane %v2156, 7
      %v2259 = vsel %vm388, %v2257, %v2258
      %v2260 = vrot.slane %v2157, 7
      %v2261 = vrot.slane %v2158, 7
      %v2262 = vsel %vm388, %v2260, %v2261
      %v2263 = vrot.slane %v2159, 7
      %v2264 = vrot.slane %v2160, 7
      %v2265 = vsel %vm388, %v2263, %v2264
      %v2266 = vrot.slane %v2161, 7
      %v2267 = vrot.slane %v2162, 7
      %v2268 = vsel %vm388, %v2266, %v2267
      %v2269 = vrot.slane %v2163, 7
      %v2270 = vrot.slane %v2164, 7
      %v2271 = vsel %vm388, %v2269, %v2270
      %v2272 = vrot.slane %v2165, 7
      %v2273 = vrot.slane %v2166, 7
      %v2274 = vsel %vm388, %v2272, %v2273
      %v2275 = vrot.slane %v2167, 7
      %v2276 = vrot.slane %v2168, 7
      %v2277 = vsel %vm388, %v2275, %v2276
      %v2278 = vrot.slane %v2169, 7
      %v2279 = vrot.slane %v2170, 7
      %v2280 = vsel %vm388, %v2278, %v2279
      %v2281 = vrot.slane %v2171, 7
      %v2282 = vrot.slane %v2172, 7
      %v2283 = vsel %vm388, %v2281, %v2282
      %v2284 = vrot.slane %v2173, 7
      %v2285 = vrot.slane %v2174, 7
      %v2286 = vsel %vm388, %v2284, %v2285
      %v2334 = vrot.slane %v2146, 5
      %v2335 = vrot.slane %v2144, 5
      %v2336 = vrot.slane %v2148, 5
      %v2337 = vrot.slane %v2150, 5
      %v2338 = vrot.slane %v2152, 5
      %v2339 = vrot.slane %v2154, 5
      %v2340 = vrot.slane %v2156, 5
      %v2341 = vrot.slane %v2158, 5
      %v2342 = vrot.slane %v2160, 5
      %v2343 = vrot.slane %v2162, 5
      %v2344 = vrot.slane %v2164, 5
      %v2345 = vrot.slane %v2166, 5
      %v2346 = vrot.slane %v2168, 5
      %v2347 = vrot.slane %v2170, 5
      %v2348 = vrot.slane %v2172, 5
      %v2349 = vrot.slane %v2174, 5
      %v2366 = vsel %vm388, %v2191, %v2239
      %v2367 = vsel %vm388, %v2192, %v2242
      %v2368 = vsel %vm388, %v2193, %v2245
      %v2369 = vsel %vm388, %v2194, %v2248
      %v2370 = vsel %vm388, %v2195, %v2251
      %v2371 = vsel %vm388, %v2196, %v2254
      %v2372 = vsel %vm388, %v2197, %v2257
      %v2373 = vsel %vm388, %v2198, %v2260
      %v2374 = vsel %vm388, %v2199, %v2263
      %v2375 = vsel %vm388, %v2200, %v2266
      %v2376 = vsel %vm388, %v2201, %v2269
      %v2377 = vsel %vm388, %v2202, %v2272
      %v2378 = vsel %vm388, %v2203, %v2275
      %v2379 = vsel %vm388, %v2204, %v2278
      %v2380 = vsel %vm388, %v2205, %v2281
      %v2381 = vsel %vm388, %v2206, %v2284
      %v2382 = vsel %vm388, %v2240, %v2334
      %v2383 = vsel %vm388, %v2243, %v2335
      %v2384 = vsel %vm388, %v2246, %v2336
      %v2385 = vsel %vm388, %v2249, %v2337
      %v2386 = vsel %vm388, %v2252, %v2338
      %v2387 = vsel %vm388, %v2255, %v2339
      %v2388 = vsel %vm388, %v2258, %v2340
      %v2389 = vsel %vm388, %v2261, %v2341
      %v2390 = vsel %vm388, %v2264, %v2342
      %v2391 = vsel %vm388, %v2267, %v2343
      %v2392 = vsel %vm388, %v2270, %v2344
      %v2393 = vsel %vm388, %v2273, %v2345
      %v2394 = vsel %vm388, %v2276, %v2346
      %v2395 = vsel %vm388, %v2279, %v2347
      %v2396 = vsel %vm388, %v2282, %v2348
      %v2397 = vsel %vm388, %v2285, %v2349
      %v2428 = vrot.slane %v2366, 1
      %v2429 = vrot.slane %v2241, 1
      %v2430 = vsel %vm578, %v2428, %v2429
      %v2431 = vrot.slane %v2382, 1
      %v2432 = vsel %vm578, %v2429, %v2431
      %v2433 = vrot.slane %v2367, 1
      %v2434 = vrot.slane %v2244, 1
      %v2435 = vsel %vm578, %v2433, %v2434
      %v2436 = vrot.slane %v2383, 1
      %v2437 = vsel %vm578, %v2434, %v2436
      %v2438 = vrot.slane %v2368, 1
      %v2439 = vrot.slane %v2247, 1
      %v2440 = vsel %vm578, %v2438, %v2439
      %v2441 = vrot.slane %v2384, 1
      %v2442 = vsel %vm578, %v2439, %v2441
      %v2443 = vrot.slane %v2369, 1
      %v2444 = vrot.slane %v2250, 1
      %v2445 = vsel %vm578, %v2443, %v2444
      %v2446 = vrot.slane %v2385, 1
      %v2447 = vsel %vm578, %v2444, %v2446
      %v2448 = vrot.slane %v2370, 1
      %v2449 = vrot.slane %v2253, 1
      %v2450 = vsel %vm578, %v2448, %v2449
      %v2451 = vrot.slane %v2386, 1
      %v2452 = vsel %vm578, %v2449, %v2451
      %v2453 = vrot.slane %v2371, 1
      %v2454 = vrot.slane %v2256, 1
      %v2455 = vsel %vm578, %v2453, %v2454
      %v2456 = vrot.slane %v2387, 1
      %v2457 = vsel %vm578, %v2454, %v2456
      %v2458 = vrot.slane %v2372, 1
      %v2459 = vrot.slane %v2259, 1
      %v2460 = vsel %vm578, %v2458, %v2459
      %v2461 = vrot.slane %v2388, 1
      %v2462 = vsel %vm578, %v2459, %v2461
      %v2463 = vrot.slane %v2373, 1
      %v2464 = vrot.slane %v2262, 1
      %v2465 = vsel %vm578, %v2463, %v2464
      %v2466 = vrot.slane %v2389, 1
      %v2467 = vsel %vm578, %v2464, %v2466
      %v2468 = vrot.slane %v2374, 1
      %v2469 = vrot.slane %v2265, 1
      %v2470 = vsel %vm578, %v2468, %v2469
      %v2471 = vrot.slane %v2390, 1
      %v2472 = vsel %vm578, %v2469, %v2471
      %v2473 = vrot.slane %v2375, 1
      %v2474 = vrot.slane %v2268, 1
      %v2475 = vsel %vm578, %v2473, %v2474
      %v2476 = vrot.slane %v2391, 1
      %v2477 = vsel %vm578, %v2474, %v2476
      %v2478 = vrot.slane %v2376, 1
      %v2479 = vrot.slane %v2271, 1
      %v2480 = vsel %vm578, %v2478, %v2479
      %v2481 = vrot.slane %v2392, 1
      %v2482 = vsel %vm578, %v2479, %v2481
      %v2483 = vrot.slane %v2377, 1
      %v2484 = vrot.slane %v2274, 1
      %v2485 = vsel %vm578, %v2483, %v2484
      %v2486 = vrot.slane %v2393, 1
      %v2487 = vsel %vm578, %v2484, %v2486
      %v2488 = vrot.slane %v2378, 1
      %v2489 = vrot.slane %v2277, 1
      %v2490 = vsel %vm578, %v2488, %v2489
      %v2491 = vrot.slane %v2394, 1
      %v2492 = vsel %vm578, %v2489, %v2491
      %v2493 = vrot.slane %v2379, 1
      %v2494 = vrot.slane %v2280, 1
      %v2495 = vsel %vm578, %v2493, %v2494
      %v2496 = vrot.slane %v2395, 1
      %v2497 = vsel %vm578, %v2494, %v2496
      %v2498 = vrot.slane %v2380, 1
      %v2499 = vrot.slane %v2283, 1
      %v2500 = vsel %vm578, %v2498, %v2499
      %v2501 = vrot.slane %v2396, 1
      %v2502 = vsel %vm578, %v2499, %v2501
      %v2503 = vrot.slane %v2366, 2
      %v2504 = vrot.slane %v2241, 2
      %v2505 = vsel %vm654, %v2503, %v2504
      %v2506 = vrot.slane %v2382, 2
      %v2507 = vsel %vm654, %v2504, %v2506
      %v2508 = vrot.slane %v2367, 2
      %v2509 = vrot.slane %v2244, 2
      %v2510 = vsel %vm654, %v2508, %v2509
      %v2511 = vrot.slane %v2383, 2
      %v2512 = vsel %vm654, %v2509, %v2511
      %v2513 = vrot.slane %v2368, 2
      %v2514 = vrot.slane %v2247, 2
      %v2515 = vsel %vm654, %v2513, %v2514
      %v2516 = vrot.slane %v2384, 2
      %v2517 = vsel %vm654, %v2514, %v2516
      %v2518 = vrot.slane %v2369, 2
      %v2519 = vrot.slane %v2250, 2
      %v2520 = vsel %vm654, %v2518, %v2519
      %v2521 = vrot.slane %v2385, 2
      %v2522 = vsel %vm654, %v2519, %v2521
      %v2523 = vrot.slane %v2370, 2
      %v2524 = vrot.slane %v2253, 2
      %v2525 = vsel %vm654, %v2523, %v2524
      %v2526 = vrot.slane %v2386, 2
      %v2527 = vsel %vm654, %v2524, %v2526
      %v2528 = vrot.slane %v2371, 2
      %v2529 = vrot.slane %v2256, 2
      %v2530 = vsel %vm654, %v2528, %v2529
      %v2531 = vrot.slane %v2387, 2
      %v2532 = vsel %vm654, %v2529, %v2531
      %v2533 = vrot.slane %v2372, 2
      %v2534 = vrot.slane %v2259, 2
      %v2535 = vsel %vm654, %v2533, %v2534
      %v2536 = vrot.slane %v2388, 2
      %v2537 = vsel %vm654, %v2534, %v2536
      %v2538 = vrot.slane %v2373, 2
      %v2539 = vrot.slane %v2262, 2
      %v2540 = vsel %vm654, %v2538, %v2539
      %v2541 = vrot.slane %v2389, 2
      %v2542 = vsel %vm654, %v2539, %v2541
      %v2543 = vrot.slane %v2374, 2
      %v2544 = vrot.slane %v2265, 2
      %v2545 = vsel %vm654, %v2543, %v2544
      %v2546 = vrot.slane %v2390, 2
      %v2547 = vsel %vm654, %v2544, %v2546
      %v2548 = vrot.slane %v2375, 2
      %v2549 = vrot.slane %v2268, 2
      %v2550 = vsel %vm654, %v2548, %v2549
      %v2551 = vrot.slane %v2391, 2
      %v2552 = vsel %vm654, %v2549, %v2551
      %v2553 = vrot.slane %v2376, 2
      %v2554 = vrot.slane %v2271, 2
      %v2555 = vsel %vm654, %v2553, %v2554
      %v2556 = vrot.slane %v2392, 2
      %v2557 = vsel %vm654, %v2554, %v2556
      %v2558 = vrot.slane %v2377, 2
      %v2559 = vrot.slane %v2274, 2
      %v2560 = vsel %vm654, %v2558, %v2559
      %v2561 = vrot.slane %v2393, 2
      %v2562 = vsel %vm654, %v2559, %v2561
      %v2563 = vrot.slane %v2378, 2
      %v2564 = vrot.slane %v2277, 2
      %v2565 = vsel %vm654, %v2563, %v2564
      %v2566 = vrot.slane %v2394, 2
      %v2567 = vsel %vm654, %v2564, %v2566
      %v2568 = vrot.slane %v2379, 2
      %v2569 = vrot.slane %v2280, 2
      %v2570 = vsel %vm654, %v2568, %v2569
      %v2571 = vrot.slane %v2395, 2
      %v2572 = vsel %vm654, %v2569, %v2571
      %v2573 = vrot.slane %v2380, 2
      %v2574 = vrot.slane %v2283, 2
      %v2575 = vsel %vm654, %v2573, %v2574
      %v2576 = vrot.slane %v2396, 2
      %v2577 = vsel %vm654, %v2574, %v2576
      %v2580 = vrot.slane %v2381, 1
      %v2581 = vrot.slane %v2286, 1
      %v2582 = vsel %vm578, %v2580, %v2581
      %v2583 = vrot.slane %v2397, 1
      %v2584 = vsel %vm578, %v2581, %v2583
      %v2585 = vrot.slane %v2381, 2
      %v2586 = vrot.slane %v2286, 2
      %v2587 = vsel %vm654, %v2585, %v2586
      %v2588 = vrot.slane %v2397, 2
      %v2589 = vsel %vm654, %v2586, %v2588
      %2590 = vrot.lane.b32.xlu0 %v2430, 4
      %v2591 = vpop.permute.xlu0 %2590
      %2592 = vrot.lane.b32.xlu0 %v2432, 4
      %v2593 = vpop.permute.xlu0 %2592
      %2594 = vrot.lane.b32.xlu0 %v2435, 4
      %v2595 = vpop.permute.xlu0 %2594
      %2596 = vrot.lane.b32.xlu0 %v2437, 4
      %v2597 = vpop.permute.xlu0 %2596
      %2598 = vrot.lane.b32.xlu0 %v2440, 4
      %v2599 = vpop.permute.xlu0 %2598
      %2600 = vrot.lane.b32.xlu0 %v2442, 4
      %v2601 = vpop.permute.xlu0 %2600
      %2602 = vrot.lane.b32.xlu0 %v2445, 4
      %v2603 = vpop.permute.xlu0 %2602
      %2604 = vrot.lane.b32.xlu0 %v2447, 4
      %v2605 = vpop.permute.xlu0 %2604
      %2606 = vrot.lane.b32.xlu0 %v2450, 4
      %v2607 = vpop.permute.xlu0 %2606
      %2608 = vrot.lane.b32.xlu0 %v2452, 4
      %v2609 = vpop.permute.xlu0 %2608
      %2610 = vrot.lane.b32.xlu0 %v2455, 4
      %v2611 = vpop.permute.xlu0 %2610
      %2612 = vrot.lane.b32.xlu0 %v2457, 4
      %v2613 = vpop.permute.xlu0 %2612
      %2614 = vrot.lane.b32.xlu0 %v2460, 4
      %v2615 = vpop.permute.xlu0 %2614
      %2616 = vrot.lane.b32.xlu0 %v2462, 4
      %v2617 = vpop.permute.xlu0 %2616
      %2618 = vrot.lane.b32.xlu0 %v2465, 4
      %v2619 = vpop.permute.xlu0 %2618
      %2620 = vrot.lane.b32.xlu0 %v2467, 4
      %v2621 = vpop.permute.xlu0 %2620
      %2622 = vrot.lane.b32.xlu0 %v2470, 4
      %v2623 = vpop.permute.xlu0 %2622
      %2624 = vrot.lane.b32.xlu0 %v2472, 4
      %v2625 = vpop.permute.xlu0 %2624
      %2626 = vrot.lane.b32.xlu0 %v2475, 4
      %v2627 = vpop.permute.xlu0 %2626
      %2628 = vrot.lane.b32.xlu0 %v2477, 4
      %v2629 = vpop.permute.xlu0 %2628
      %2630 = vrot.lane.b32.xlu0 %v2480, 4
      %v2631 = vpop.permute.xlu0 %2630
      %2632 = vrot.lane.b32.xlu0 %v2482, 4
      %v2633 = vpop.permute.xlu0 %2632
      %2634 = vrot.lane.b32.xlu0 %v2485, 4
      %v2635 = vpop.permute.xlu0 %2634
      %2636 = vrot.lane.b32.xlu0 %v2487, 4
      %v2637 = vpop.permute.xlu0 %2636
      %2638 = vrot.lane.b32.xlu0 %v2490, 4
      %v2639 = vpop.permute.xlu0 %2638
      %2640 = vrot.lane.b32.xlu0 %v2492, 4
      %v2641 = vpop.permute.xlu0 %2640
      %2642 = vrot.lane.b32.xlu0 %v2495, 4
      %v2643 = vpop.permute.xlu0 %2642
      %2644 = vrot.lane.b32.xlu0 %v2497, 4
      %v2645 = vpop.permute.xlu0 %2644
      %2646 = vrot.lane.b32.xlu0 %v2500, 4
      %v2647 = vpop.permute.xlu0 %2646
      %2648 = vrot.lane.b32.xlu0 %v2502, 4
      %v2649 = vpop.permute.xlu0 %2648
      %2680 = vrot.lane.b32.xlu0 %v2505, 8
      %v2681 = vpop.permute.xlu0 %2680
      %2682 = vrot.lane.b32.xlu0 %v2507, 8
      %v2683 = vpop.permute.xlu0 %2682
      %2684 = vrot.lane.b32.xlu0 %v2510, 8
      %v2685 = vpop.permute.xlu0 %2684
      %2686 = vrot.lane.b32.xlu0 %v2512, 8
      %v2687 = vpop.permute.xlu0 %2686
      %2688 = vrot.lane.b32.xlu0 %v2515, 8
      %v2689 = vpop.permute.xlu0 %2688
      %2690 = vrot.lane.b32.xlu0 %v2517, 8
      %v2691 = vpop.permute.xlu0 %2690
      %2692 = vrot.lane.b32.xlu0 %v2520, 8
      %v2693 = vpop.permute.xlu0 %2692
      %2694 = vrot.lane.b32.xlu0 %v2522, 8
      %v2695 = vpop.permute.xlu0 %2694
      %2696 = vrot.lane.b32.xlu0 %v2525, 8
      %v2697 = vpop.permute.xlu0 %2696
      %2698 = vrot.lane.b32.xlu0 %v2527, 8
      %v2699 = vpop.permute.xlu0 %2698
      %2700 = vrot.lane.b32.xlu0 %v2530, 8
      %v2701 = vpop.permute.xlu0 %2700
      %2702 = vrot.lane.b32.xlu0 %v2532, 8
      %v2703 = vpop.permute.xlu0 %2702
      %2704 = vrot.lane.b32.xlu0 %v2535, 8
      %v2705 = vpop.permute.xlu0 %2704
      %2706 = vrot.lane.b32.xlu0 %v2537, 8
      %v2707 = vpop.permute.xlu0 %2706
      %2708 = vrot.lane.b32.xlu0 %v2540, 8
      %v2709 = vpop.permute.xlu0 %2708
      %2710 = vrot.lane.b32.xlu0 %v2542, 8
      %v2711 = vpop.permute.xlu0 %2710
      %2712 = vrot.lane.b32.xlu0 %v2545, 8
      %v2713 = vpop.permute.xlu0 %2712
      %2714 = vrot.lane.b32.xlu0 %v2547, 8
      %v2715 = vpop.permute.xlu0 %2714
      %2716 = vrot.lane.b32.xlu0 %v2550, 8
      %v2717 = vpop.permute.xlu0 %2716
      %2718 = vrot.lane.b32.xlu0 %v2552, 8
      %v2719 = vpop.permute.xlu0 %2718
      %2720 = vrot.lane.b32.xlu0 %v2555, 8
      %v2721 = vpop.permute.xlu0 %2720
      %2722 = vrot.lane.b32.xlu0 %v2557, 8
      %v2723 = vpop.permute.xlu0 %2722
      %2724 = vrot.lane.b32.xlu0 %v2560, 8
      %v2725 = vpop.permute.xlu0 %2724
      %2726 = vrot.lane.b32.xlu0 %v2562, 8
      %v2727 = vpop.permute.xlu0 %2726
      %2728 = vrot.lane.b32.xlu0 %v2565, 8
      %v2729 = vpop.permute.xlu0 %2728
      %2730 = vrot.lane.b32.xlu0 %v2567, 8
      %v2731 = vpop.permute.xlu0 %2730
      %2732 = vrot.lane.b32.xlu0 %v2570, 8
      %v2733 = vpop.permute.xlu0 %2732
      %2734 = vrot.lane.b32.xlu0 %v2572, 8
      %v2735 = vpop.permute.xlu0 %2734
      %2736 = vrot.lane.b32.xlu0 %v2575, 8
      %v2737 = vpop.permute.xlu0 %2736
      %2738 = vrot.lane.b32.xlu0 %v2577, 8
      %v2739 = vpop.permute.xlu0 %2738
      %2770 = vrot.lane.b32.xlu0 %v2367, 12
      %v2771 = vpop.permute.xlu0 %2770
      %2772 = vrot.lane.b32.xlu0 %v2244, 12
      %v2773 = vpop.permute.xlu0 %2772
      %2774 = vrot.lane.b32.xlu0 %v2366, 12
      %v2775 = vpop.permute.xlu0 %2774
      %2776 = vrot.lane.b32.xlu0 %v2241, 12
      %v2777 = vpop.permute.xlu0 %2776
      %2778 = vrot.lane.b32.xlu0 %v2368, 12
      %v2779 = vpop.permute.xlu0 %2778
      %2780 = vrot.lane.b32.xlu0 %v2247, 12
      %v2781 = vpop.permute.xlu0 %2780
      %2782 = vrot.lane.b32.xlu0 %v2369, 12
      %v2783 = vpop.permute.xlu0 %2782
      %2784 = vrot.lane.b32.xlu0 %v2250, 12
      %v2785 = vpop.permute.xlu0 %2784
      %2786 = vrot.lane.b32.xlu0 %v2370, 12
      %v2787 = vpop.permute.xlu0 %2786
      %2788 = vrot.lane.b32.xlu0 %v2253, 12
      %v2789 = vpop.permute.xlu0 %2788
      %2790 = vrot.lane.b32.xlu0 %v2371, 12
      %v2791 = vpop.permute.xlu0 %2790
      %2792 = vrot.lane.b32.xlu0 %v2256, 12
      %v2793 = vpop.permute.xlu0 %2792
      %2794 = vrot.lane.b32.xlu0 %v2372, 12
      %v2795 = vpop.permute.xlu0 %2794
      %2796 = vrot.lane.b32.xlu0 %v2259, 12
      %v2797 = vpop.permute.xlu0 %2796
      %2798 = vrot.lane.b32.xlu0 %v2373, 12
      %v2799 = vpop.permute.xlu0 %2798
      %2800 = vrot.lane.b32.xlu0 %v2262, 12
      %v2801 = vpop.permute.xlu0 %2800
      %2802 = vrot.lane.b32.xlu0 %v2374, 12
      %v2803 = vpop.permute.xlu0 %2802
      %2804 = vrot.lane.b32.xlu0 %v2265, 12
      %v2805 = vpop.permute.xlu0 %2804
      %2806 = vrot.lane.b32.xlu0 %v2375, 12
      %v2807 = vpop.permute.xlu0 %2806
      %2808 = vrot.lane.b32.xlu0 %v2268, 12
      %v2809 = vpop.permute.xlu0 %2808
      %2810 = vrot.lane.b32.xlu0 %v2376, 12
      %v2811 = vpop.permute.xlu0 %2810
      %2812 = vrot.lane.b32.xlu0 %v2271, 12
      %v2813 = vpop.permute.xlu0 %2812
      %2814 = vrot.lane.b32.xlu0 %v2377, 12
      %v2815 = vpop.permute.xlu0 %2814
      %2816 = vrot.lane.b32.xlu0 %v2274, 12
      %v2817 = vpop.permute.xlu0 %2816
      %2818 = vrot.lane.b32.xlu0 %v2378, 12
      %v2819 = vpop.permute.xlu0 %2818
      %2820 = vrot.lane.b32.xlu0 %v2277, 12
      %v2821 = vpop.permute.xlu0 %2820
      %2822 = vrot.lane.b32.xlu0 %v2379, 12
      %v2823 = vpop.permute.xlu0 %2822
      %2824 = vrot.lane.b32.xlu0 %v2280, 12
      %v2825 = vpop.permute.xlu0 %2824
      %2826 = vrot.lane.b32.xlu0 %v2380, 12
      %v2827 = vpop.permute.xlu0 %2826
      %2828 = vrot.lane.b32.xlu0 %v2283, 12
      %v2829 = vpop.permute.xlu0 %2828
      %2830 = vrot.lane.b32.xlu0 %v2381, 12
      %v2831 = vpop.permute.xlu0 %2830
      %2832 = vrot.lane.b32.xlu0 %v2286, 12
      %v2833 = vpop.permute.xlu0 %2832
      %2866 = vrot.lane.b32.xlu0 %v2435, 16
      %v2867 = vpop.permute.xlu0 %2866
      %2868 = vrot.lane.b32.xlu0 %v2437, 16
      %v2869 = vpop.permute.xlu0 %2868
      %2870 = vrot.lane.b32.xlu0 %v2430, 16
      %v2871 = vpop.permute.xlu0 %2870
      %2872 = vrot.lane.b32.xlu0 %v2432, 16
      %v2873 = vpop.permute.xlu0 %2872
      %2874 = vrot.lane.b32.xlu0 %v2440, 16
      %v2875 = vpop.permute.xlu0 %2874
      %2876 = vrot.lane.b32.xlu0 %v2442, 16
      %v2877 = vpop.permute.xlu0 %2876
      %2878 = vrot.lane.b32.xlu0 %v2445, 16
      %v2879 = vpop.permute.xlu0 %2878
      %2880 = vrot.lane.b32.xlu0 %v2447, 16
      %v2881 = vpop.permute.xlu0 %2880
      %2882 = vrot.lane.b32.xlu0 %v2450, 16
      %v2883 = vpop.permute.xlu0 %2882
      %2884 = vrot.lane.b32.xlu0 %v2452, 16
      %v2885 = vpop.permute.xlu0 %2884
      %2886 = vrot.lane.b32.xlu0 %v2455, 16
      %v2887 = vpop.permute.xlu0 %2886
      %2888 = vrot.lane.b32.xlu0 %v2457, 16
      %v2889 = vpop.permute.xlu0 %2888
      %2890 = vrot.lane.b32.xlu0 %v2460, 16
      %v2891 = vpop.permute.xlu0 %2890
      %2892 = vrot.lane.b32.xlu0 %v2462, 16
      %v2893 = vpop.permute.xlu0 %2892
      %2894 = vrot.lane.b32.xlu0 %v2465, 16
      %v2895 = vpop.permute.xlu0 %2894
      %2896 = vrot.lane.b32.xlu0 %v2467, 16
      %v2897 = vpop.permute.xlu0 %2896
      %2898 = vrot.lane.b32.xlu0 %v2470, 16
      %v2899 = vpop.permute.xlu0 %2898
      %2900 = vrot.lane.b32.xlu0 %v2472, 16
      %v2901 = vpop.permute.xlu0 %2900
      %2902 = vrot.lane.b32.xlu0 %v2475, 16
      %v2903 = vpop.permute.xlu0 %2902
      %2904 = vrot.lane.b32.xlu0 %v2477, 16
      %v2905 = vpop.permute.xlu0 %2904
      %2906 = vrot.lane.b32.xlu0 %v2480, 16
      %v2907 = vpop.permute.xlu0 %2906
      %2908 = vrot.lane.b32.xlu0 %v2482, 16
      %v2909 = vpop.permute.xlu0 %2908
      %2910 = vrot.lane.b32.xlu0 %v2485, 16
      %v2911 = vpop.permute.xlu0 %2910
      %2912 = vrot.lane.b32.xlu0 %v2487, 16
      %v2913 = vpop.permute.xlu0 %2912
      %2914 = vrot.lane.b32.xlu0 %v2490, 16
      %v2915 = vpop.permute.xlu0 %2914
      %2916 = vrot.lane.b32.xlu0 %v2492, 16
      %v2917 = vpop.permute.xlu0 %2916
      %2918 = vrot.lane.b32.xlu0 %v2495, 16
      %v2919 = vpop.permute.xlu0 %2918
      %2920 = vrot.lane.b32.xlu0 %v2497, 16
      %v2921 = vpop.permute.xlu0 %2920
      %2922 = vrot.lane.b32.xlu0 %v2500, 16
      %v2923 = vpop.permute.xlu0 %2922
      %2924 = vrot.lane.b32.xlu0 %v2502, 16
      %v2925 = vpop.permute.xlu0 %2924
      %2926 = vrot.lane.b32.xlu0 %v2582, 16
      %v2927 = vpop.permute.xlu0 %2926
      %2928 = vrot.lane.b32.xlu0 %v2584, 16
      %v2929 = vpop.permute.xlu0 %2928
      %2962 = vrot.lane.b32.xlu0 %v2510, 20
      %v2963 = vpop.permute.xlu0 %2962
      %2964 = vrot.lane.b32.xlu0 %v2512, 20
      %v2965 = vpop.permute.xlu0 %2964
      %2966 = vrot.lane.b32.xlu0 %v2505, 20
      %v2967 = vpop.permute.xlu0 %2966
      %2968 = vrot.lane.b32.xlu0 %v2507, 20
      %v2969 = vpop.permute.xlu0 %2968
      %2970 = vrot.lane.b32.xlu0 %v2515, 20
      %v2971 = vpop.permute.xlu0 %2970
      %2972 = vrot.lane.b32.xlu0 %v2517, 20
      %v2973 = vpop.permute.xlu0 %2972
      %2974 = vrot.lane.b32.xlu0 %v2520, 20
      %v2975 = vpop.permute.xlu0 %2974
      %2976 = vrot.lane.b32.xlu0 %v2522, 20
      %v2977 = vpop.permute.xlu0 %2976
      %2978 = vrot.lane.b32.xlu0 %v2525, 20
      %v2979 = vpop.permute.xlu0 %2978
      %2980 = vrot.lane.b32.xlu0 %v2527, 20
      %v2981 = vpop.permute.xlu0 %2980
      %2982 = vrot.lane.b32.xlu0 %v2530, 20
      %v2983 = vpop.permute.xlu0 %2982
      %2984 = vrot.lane.b32.xlu0 %v2532, 20
      %v2985 = vpop.permute.xlu0 %2984
      %2986 = vrot.lane.b32.xlu0 %v2535, 20
      %v2987 = vpop.permute.xlu0 %2986
      %2988 = vrot.lane.b32.xlu0 %v2537, 20
      %v2989 = vpop.permute.xlu0 %2988
      %2990 = vrot.lane.b32.xlu0 %v2540, 20
      %v2991 = vpop.permute.xlu0 %2990
      %2992 = vrot.lane.b32.xlu0 %v2542, 20
      %v2993 = vpop.permute.xlu0 %2992
      %2994 = vrot.lane.b32.xlu0 %v2545, 20
      %v2995 = vpop.permute.xlu0 %2994
      %2996 = vrot.lane.b32.xlu0 %v2547, 20
      %v2997 = vpop.permute.xlu0 %2996
      %2998 = vrot.lane.b32.xlu0 %v2550, 20
      %v2999 = vpop.permute.xlu0 %2998
      %3000 = vrot.lane.b32.xlu0 %v2552, 20
      %v3001 = vpop.permute.xlu0 %3000
      %3002 = vrot.lane.b32.xlu0 %v2555, 20
      %v3003 = vpop.permute.xlu0 %3002
      %3004 = vrot.lane.b32.xlu0 %v2557, 20
      %v3005 = vpop.permute.xlu0 %3004
      %3006 = vrot.lane.b32.xlu0 %v2560, 20
      %v3007 = vpop.permute.xlu0 %3006
      %3008 = vrot.lane.b32.xlu0 %v2562, 20
      %v3009 = vpop.permute.xlu0 %3008
      %3010 = vrot.lane.b32.xlu0 %v2565, 20
      %v3011 = vpop.permute.xlu0 %3010
      %3012 = vrot.lane.b32.xlu0 %v2567, 20
      %v3013 = vpop.permute.xlu0 %3012
      %3014 = vrot.lane.b32.xlu0 %v2570, 20
      %v3015 = vpop.permute.xlu0 %3014
      %3016 = vrot.lane.b32.xlu0 %v2572, 20
      %v3017 = vpop.permute.xlu0 %3016
      %3018 = vrot.lane.b32.xlu0 %v2575, 20
      %v3019 = vpop.permute.xlu0 %3018
      %3020 = vrot.lane.b32.xlu0 %v2577, 20
      %v3021 = vpop.permute.xlu0 %3020
      %3022 = vrot.lane.b32.xlu0 %v2587, 20
      %v3023 = vpop.permute.xlu0 %3022
      %3024 = vrot.lane.b32.xlu0 %v2589, 20
      %v3025 = vpop.permute.xlu0 %3024
      %3058 = vrot.lane.b32.xlu0 %v2366, 24
      %v3059 = vpop.permute.xlu0 %3058
      %3060 = vrot.lane.b32.xlu0 %v2241, 24
      %v3061 = vpop.permute.xlu0 %3060
      %3062 = vrot.lane.b32.xlu0 %v2368, 24
      %v3063 = vpop.permute.xlu0 %3062
      %3064 = vrot.lane.b32.xlu0 %v2247, 24
      %v3065 = vpop.permute.xlu0 %3064
      %3066 = vrot.lane.b32.xlu0 %v2369, 24
      %v3067 = vpop.permute.xlu0 %3066
      %3068 = vrot.lane.b32.xlu0 %v2250, 24
      %v3069 = vpop.permute.xlu0 %3068
      %3070 = vrot.lane.b32.xlu0 %v2370, 24
      %v3071 = vpop.permute.xlu0 %3070
      %3072 = vrot.lane.b32.xlu0 %v2253, 24
      %v3073 = vpop.permute.xlu0 %3072
      %3074 = vrot.lane.b32.xlu0 %v2371, 24
      %v3075 = vpop.permute.xlu0 %3074
      %3076 = vrot.lane.b32.xlu0 %v2256, 24
      %v3077 = vpop.permute.xlu0 %3076
      %3078 = vrot.lane.b32.xlu0 %v2372, 24
      %v3079 = vpop.permute.xlu0 %3078
      %3080 = vrot.lane.b32.xlu0 %v2259, 24
      %v3081 = vpop.permute.xlu0 %3080
      %3082 = vrot.lane.b32.xlu0 %v2373, 24
      %v3083 = vpop.permute.xlu0 %3082
      %3084 = vrot.lane.b32.xlu0 %v2262, 24
      %v3085 = vpop.permute.xlu0 %3084
      %3086 = vrot.lane.b32.xlu0 %v2374, 24
      %v3087 = vpop.permute.xlu0 %3086
      %3088 = vrot.lane.b32.xlu0 %v2265, 24
      %v3089 = vpop.permute.xlu0 %3088
      %3090 = vrot.lane.b32.xlu0 %v2375, 24
      %v3091 = vpop.permute.xlu0 %3090
      %3092 = vrot.lane.b32.xlu0 %v2268, 24
      %v3093 = vpop.permute.xlu0 %3092
      %3094 = vrot.lane.b32.xlu0 %v2376, 24
      %v3095 = vpop.permute.xlu0 %3094
      %3096 = vrot.lane.b32.xlu0 %v2271, 24
      %v3097 = vpop.permute.xlu0 %3096
      %3098 = vrot.lane.b32.xlu0 %v2377, 24
      %v3099 = vpop.permute.xlu0 %3098
      %3100 = vrot.lane.b32.xlu0 %v2274, 24
      %v3101 = vpop.permute.xlu0 %3100
      %3102 = vrot.lane.b32.xlu0 %v2378, 24
      %v3103 = vpop.permute.xlu0 %3102
      %3104 = vrot.lane.b32.xlu0 %v2277, 24
      %v3105 = vpop.permute.xlu0 %3104
      %3106 = vrot.lane.b32.xlu0 %v2379, 24
      %v3107 = vpop.permute.xlu0 %3106
      %3108 = vrot.lane.b32.xlu0 %v2280, 24
      %v3109 = vpop.permute.xlu0 %3108
      %3110 = vrot.lane.b32.xlu0 %v2380, 24
      %v3111 = vpop.permute.xlu0 %3110
      %3112 = vrot.lane.b32.xlu0 %v2283, 24
      %v3113 = vpop.permute.xlu0 %3112
      %3114 = vrot.lane.b32.xlu0 %v2381, 24
      %v3115 = vpop.permute.xlu0 %3114
      %3116 = vrot.lane.b32.xlu0 %v2286, 24
      %v3117 = vpop.permute.xlu0 %3116
      %3148 = vrot.lane.b32.xlu0 %v2430, 28
      %v3149 = vpop.permute.xlu0 %3148
      %3150 = vrot.lane.b32.xlu0 %v2432, 28
      %v3151 = vpop.permute.xlu0 %3150
      %3152 = vrot.lane.b32.xlu0 %v2440, 28
      %v3153 = vpop.permute.xlu0 %3152
      %3154 = vrot.lane.b32.xlu0 %v2442, 28
      %v3155 = vpop.permute.xlu0 %3154
      %3156 = vrot.lane.b32.xlu0 %v2445, 28
      %v3157 = vpop.permute.xlu0 %3156
      %3158 = vrot.lane.b32.xlu0 %v2447, 28
      %v3159 = vpop.permute.xlu0 %3158
      %3160 = vrot.lane.b32.xlu0 %v2450, 28
      %v3161 = vpop.permute.xlu0 %3160
      %3162 = vrot.lane.b32.xlu0 %v2452, 28
      %v3163 = vpop.permute.xlu0 %3162
      %3164 = vrot.lane.b32.xlu0 %v2455, 28
      %v3165 = vpop.permute.xlu0 %3164
      %3166 = vrot.lane.b32.xlu0 %v2457, 28
      %v3167 = vpop.permute.xlu0 %3166
      %3168 = vrot.lane.b32.xlu0 %v2460, 28
      %v3169 = vpop.permute.xlu0 %3168
      %3170 = vrot.lane.b32.xlu0 %v2462, 28
      %v3171 = vpop.permute.xlu0 %3170
      %3172 = vrot.lane.b32.xlu0 %v2465, 28
      %v3173 = vpop.permute.xlu0 %3172
      %3174 = vrot.lane.b32.xlu0 %v2467, 28
      %v3175 = vpop.permute.xlu0 %3174
      %3176 = vrot.lane.b32.xlu0 %v2470, 28
      %v3177 = vpop.permute.xlu0 %3176
      %3178 = vrot.lane.b32.xlu0 %v2472, 28
      %v3179 = vpop.permute.xlu0 %3178
      %3180 = vrot.lane.b32.xlu0 %v2475, 28
      %v3181 = vpop.permute.xlu0 %3180
      %3182 = vrot.lane.b32.xlu0 %v2477, 28
      %v3183 = vpop.permute.xlu0 %3182
      %3184 = vrot.lane.b32.xlu0 %v2480, 28
      %v3185 = vpop.permute.xlu0 %3184
      %3186 = vrot.lane.b32.xlu0 %v2482, 28
      %v3187 = vpop.permute.xlu0 %3186
      %3188 = vrot.lane.b32.xlu0 %v2485, 28
      %v3189 = vpop.permute.xlu0 %3188
      %3190 = vrot.lane.b32.xlu0 %v2487, 28
      %v3191 = vpop.permute.xlu0 %3190
      %3192 = vrot.lane.b32.xlu0 %v2490, 28
      %v3193 = vpop.permute.xlu0 %3192
      %3194 = vrot.lane.b32.xlu0 %v2492, 28
      %v3195 = vpop.permute.xlu0 %3194
      %3196 = vrot.lane.b32.xlu0 %v2495, 28
      %v3197 = vpop.permute.xlu0 %3196
      %3198 = vrot.lane.b32.xlu0 %v2497, 28
      %v3199 = vpop.permute.xlu0 %3198
      %3200 = vrot.lane.b32.xlu0 %v2500, 28
      %v3201 = vpop.permute.xlu0 %3200
      %3202 = vrot.lane.b32.xlu0 %v2502, 28
      %v3203 = vpop.permute.xlu0 %3202
      %3204 = vrot.lane.b32.xlu0 %v2582, 28
      %v3205 = vpop.permute.xlu0 %3204
      %3206 = vrot.lane.b32.xlu0 %v2584, 28
      %v3207 = vpop.permute.xlu0 %3206
      %3238 = vrot.lane.b32.xlu0 %v2505, 32
      %v3239 = vpop.permute.xlu0 %3238
      %3240 = vrot.lane.b32.xlu0 %v2507, 32
      %v3241 = vpop.permute.xlu0 %3240
      %3242 = vrot.lane.b32.xlu0 %v2515, 32
      %v3243 = vpop.permute.xlu0 %3242
      %3244 = vrot.lane.b32.xlu0 %v2517, 32
      %v3245 = vpop.permute.xlu0 %3244
      %3246 = vrot.lane.b32.xlu0 %v2520, 32
      %v3247 = vpop.permute.xlu0 %3246
      %3248 = vrot.lane.b32.xlu0 %v2522, 32
      %v3249 = vpop.permute.xlu0 %3248
      %3250 = vrot.lane.b32.xlu0 %v2525, 32
      %v3251 = vpop.permute.xlu0 %3250
      %3252 = vrot.lane.b32.xlu0 %v2527, 32
      %v3253 = vpop.permute.xlu0 %3252
      %3254 = vrot.lane.b32.xlu0 %v2530, 32
      %v3255 = vpop.permute.xlu0 %3254
      %3256 = vrot.lane.b32.xlu0 %v2532, 32
      %v3257 = vpop.permute.xlu0 %3256
      %3258 = vrot.lane.b32.xlu0 %v2535, 32
      %v3259 = vpop.permute.xlu0 %3258
      %3260 = vrot.lane.b32.xlu0 %v2537, 32
      %v3261 = vpop.permute.xlu0 %3260
      %3262 = vrot.lane.b32.xlu0 %v2540, 32
      %v3263 = vpop.permute.xlu0 %3262
      %3264 = vrot.lane.b32.xlu0 %v2542, 32
      %v3265 = vpop.permute.xlu0 %3264
      %3266 = vrot.lane.b32.xlu0 %v2545, 32
      %v3267 = vpop.permute.xlu0 %3266
      %3268 = vrot.lane.b32.xlu0 %v2547, 32
      %v3269 = vpop.permute.xlu0 %3268
      %3270 = vrot.lane.b32.xlu0 %v2550, 32
      %v3271 = vpop.permute.xlu0 %3270
      %3272 = vrot.lane.b32.xlu0 %v2552, 32
      %v3273 = vpop.permute.xlu0 %3272
      %3274 = vrot.lane.b32.xlu0 %v2555, 32
      %v3275 = vpop.permute.xlu0 %3274
      %3276 = vrot.lane.b32.xlu0 %v2557, 32
      %v3277 = vpop.permute.xlu0 %3276
      %3278 = vrot.lane.b32.xlu0 %v2560, 32
      %v3279 = vpop.permute.xlu0 %3278
      %3280 = vrot.lane.b32.xlu0 %v2562, 32
      %v3281 = vpop.permute.xlu0 %3280
      %3282 = vrot.lane.b32.xlu0 %v2565, 32
      %v3283 = vpop.permute.xlu0 %3282
      %3284 = vrot.lane.b32.xlu0 %v2567, 32
      %v3285 = vpop.permute.xlu0 %3284
      %3286 = vrot.lane.b32.xlu0 %v2570, 32
      %v3287 = vpop.permute.xlu0 %3286
      %3288 = vrot.lane.b32.xlu0 %v2572, 32
      %v3289 = vpop.permute.xlu0 %3288
      %3290 = vrot.lane.b32.xlu0 %v2575, 32
      %v3291 = vpop.permute.xlu0 %3290
      %3292 = vrot.lane.b32.xlu0 %v2577, 32
      %v3293 = vpop.permute.xlu0 %3292
      %3294 = vrot.lane.b32.xlu0 %v2587, 32
      %v3295 = vpop.permute.xlu0 %3294
      %3296 = vrot.lane.b32.xlu0 %v2589, 32
      %v3297 = vpop.permute.xlu0 %3296
      %v3328 = vsel %vm1480, %v2366, %v2591
      %v3329 = vsel %vm1480, %v2241, %v2593
      %v3330 = vsel %vm1480, %v2367, %v2595
      %v3331 = vsel %vm1480, %v2244, %v2597
      %v3332 = vsel %vm1480, %v2368, %v2599
      %v3333 = vsel %vm1480, %v2247, %v2601
      %v3334 = vsel %vm1480, %v2369, %v2603
      %v3335 = vsel %vm1480, %v2250, %v2605
      %v3336 = vsel %vm1480, %v2370, %v2607
      %v3337 = vsel %vm1480, %v2253, %v2609
      %v3338 = vsel %vm1480, %v2371, %v2611
      %v3339 = vsel %vm1480, %v2256, %v2613
      %v3340 = vsel %vm1480, %v2372, %v2615
      %v3341 = vsel %vm1480, %v2259, %v2617
      %v3342 = vsel %vm1480, %v2373, %v2619
      %v3343 = vsel %vm1480, %v2262, %v2621
      %v3344 = vsel %vm1480, %v2374, %v2623
      %v3345 = vsel %vm1480, %v2265, %v2625
      %v3346 = vsel %vm1480, %v2375, %v2627
      %v3347 = vsel %vm1480, %v2268, %v2629
      %v3348 = vsel %vm1480, %v2376, %v2631
      %v3349 = vsel %vm1480, %v2271, %v2633
      %v3350 = vsel %vm1480, %v2377, %v2635
      %v3351 = vsel %vm1480, %v2274, %v2637
      %v3352 = vsel %vm1480, %v2378, %v2639
      %v3353 = vsel %vm1480, %v2277, %v2641
      %v3354 = vsel %vm1480, %v2379, %v2643
      %v3355 = vsel %vm1480, %v2280, %v2645
      %v3356 = vsel %vm1480, %v2380, %v2647
      %v3357 = vsel %vm1480, %v2283, %v2649
      %v3358 = vsel %vm1511, %v3328, %v2681
      %v3359 = vsel %vm1511, %v3329, %v2683
      %v3360 = vsel %vm1511, %v3330, %v2685
      %v3361 = vsel %vm1511, %v3331, %v2687
      %v3362 = vsel %vm1511, %v3332, %v2689
      %v3363 = vsel %vm1511, %v3333, %v2691
      %v3364 = vsel %vm1511, %v3334, %v2693
      %v3365 = vsel %vm1511, %v3335, %v2695
      %v3366 = vsel %vm1511, %v3336, %v2697
      %v3367 = vsel %vm1511, %v3337, %v2699
      %v3368 = vsel %vm1511, %v3338, %v2701
      %v3369 = vsel %vm1511, %v3339, %v2703
      %v3370 = vsel %vm1511, %v3340, %v2705
      %v3371 = vsel %vm1511, %v3341, %v2707
      %v3372 = vsel %vm1511, %v3342, %v2709
      %v3373 = vsel %vm1511, %v3343, %v2711
      %v3374 = vsel %vm1511, %v3344, %v2713
      %v3375 = vsel %vm1511, %v3345, %v2715
      %v3376 = vsel %vm1511, %v3346, %v2717
      %v3377 = vsel %vm1511, %v3347, %v2719
      %v3378 = vsel %vm1511, %v3348, %v2721
      %v3379 = vsel %vm1511, %v3349, %v2723
      %v3380 = vsel %vm1511, %v3350, %v2725
      %v3381 = vsel %vm1511, %v3351, %v2727
      %v3382 = vsel %vm1511, %v3352, %v2729
      %v3383 = vsel %vm1511, %v3353, %v2731
      %v3384 = vsel %vm1511, %v3354, %v2733
      %v3385 = vsel %vm1511, %v3355, %v2735
      %v3386 = vsel %vm1511, %v3356, %v2737
      %v3387 = vsel %vm1511, %v3357, %v2739
      %v3388 = vsel %vm1542, %v3358, %v2771
      %v3389 = vsel %vm1542, %v3359, %v2773
      %v3390 = vsel %vm1542, %v3360, %v2775
      %v3391 = vsel %vm1542, %v3361, %v2777
      %v3392 = vsel %vm1542, %v3358, %v2779
      %v3393 = vsel %vm1542, %v3359, %v2781
      %v3394 = vsel %vm1542, %v3362, %v2783
      %v3395 = vsel %vm1542, %v3363, %v2785
      %v3396 = vsel %vm1542, %v3364, %v2787
      %v3397 = vsel %vm1542, %v3365, %v2789
      %v3398 = vsel %vm1542, %v3366, %v2791
      %v3399 = vsel %vm1542, %v3367, %v2793
      %v3400 = vsel %vm1542, %v3368, %v2795
      %v3401 = vsel %vm1542, %v3369, %v2797
      %v3402 = vsel %vm1542, %v3370, %v2799
      %v3403 = vsel %vm1542, %v3371, %v2801
      %v3404 = vsel %vm1542, %v3372, %v2803
      %v3405 = vsel %vm1542, %v3373, %v2805
      %v3406 = vsel %vm1542, %v3374, %v2807
      %v3407 = vsel %vm1542, %v3375, %v2809
      %v3408 = vsel %vm1542, %v3376, %v2811
      %v3409 = vsel %vm1542, %v3377, %v2813
      %v3410 = vsel %vm1542, %v3378, %v2815
      %v3411 = vsel %vm1542, %v3379, %v2817
      %v3412 = vsel %vm1542, %v3380, %v2819
      %v3413 = vsel %vm1542, %v3381, %v2821
      %v3414 = vsel %vm1542, %v3382, %v2823
      %v3415 = vsel %vm1542, %v3383, %v2825
      %v3416 = vsel %vm1542, %v3384, %v2827
      %v3417 = vsel %vm1542, %v3385, %v2829
      %v3418 = vsel %vm1542, %v3386, %v2831
      %v3419 = vsel %vm1542, %v3387, %v2833
      %v3420 = vsel %vm1575, %v3388, %v2867
      %v3421 = vsel %vm1575, %v3389, %v2869
      %v3422 = vsel %vm1575, %v3390, %v2871
      %v3423 = vsel %vm1575, %v3391, %v2873
      %v3424 = vsel %vm1575, %v3392, %v2875
      %v3425 = vsel %vm1575, %v3393, %v2877
      %v3426 = vsel %vm1575, %v3394, %v2879
      %v3427 = vsel %vm1575, %v3395, %v2881
      %v3428 = vsel %vm1575, %v3396, %v2883
      %v3429 = vsel %vm1575, %v3397, %v2885
      %v3430 = vsel %vm1575, %v3398, %v2887
      %v3431 = vsel %vm1575, %v3399, %v2889
      %v3432 = vsel %vm1575, %v3400, %v2891
      %v3433 = vsel %vm1575, %v3401, %v2893
      %v3434 = vsel %vm1575, %v3402, %v2895
      %v3435 = vsel %vm1575, %v3403, %v2897
      %v3436 = vsel %vm1575, %v3404, %v2899
      %v3437 = vsel %vm1575, %v3405, %v2901
      %v3438 = vsel %vm1575, %v3406, %v2903
      %v3439 = vsel %vm1575, %v3407, %v2905
      %v3440 = vsel %vm1575, %v3408, %v2907
      %v3441 = vsel %vm1575, %v3409, %v2909
      %v3442 = vsel %vm1575, %v3410, %v2911
      %v3443 = vsel %vm1575, %v3411, %v2913
      %v3444 = vsel %vm1575, %v3412, %v2915
      %v3445 = vsel %vm1575, %v3413, %v2917
      %v3446 = vsel %vm1575, %v3414, %v2919
      %v3447 = vsel %vm1575, %v3415, %v2921
      %v3448 = vsel %vm1575, %v3416, %v2923
      %v3449 = vsel %vm1575, %v3417, %v2925
      %v3450 = vsel %vm1575, %v3418, %v2927
      %v3451 = vsel %vm1575, %v3419, %v2929
      %v3452 = vsel %vm1608, %v3420, %v2963
      %v3453 = vsel %vm1608, %v3421, %v2965
      %v3454 = vsel %vm1608, %v3422, %v2967
      %v3455 = vsel %vm1608, %v3423, %v2969
      %v3456 = vsel %vm1608, %v3424, %v2971
      %v3457 = vsel %vm1608, %v3425, %v2973
      %v3458 = vsel %vm1608, %v3426, %v2975
      %v3459 = vsel %vm1608, %v3427, %v2977
      %v3460 = vsel %vm1608, %v3428, %v2979
      %v3461 = vsel %vm1608, %v3429, %v2981
      %v3462 = vsel %vm1608, %v3430, %v2983
      %v3463 = vsel %vm1608, %v3431, %v2985
      %v3464 = vsel %vm1608, %v3432, %v2987
      %v3465 = vsel %vm1608, %v3433, %v2989
      %v3466 = vsel %vm1608, %v3434, %v2991
      %v3467 = vsel %vm1608, %v3435, %v2993
      %v3468 = vsel %vm1608, %v3436, %v2995
      %v3469 = vsel %vm1608, %v3437, %v2997
      %v3470 = vsel %vm1608, %v3438, %v2999
      %v3471 = vsel %vm1608, %v3439, %v3001
      %v3472 = vsel %vm1608, %v3440, %v3003
      %v3473 = vsel %vm1608, %v3441, %v3005
      %v3474 = vsel %vm1608, %v3442, %v3007
      %v3475 = vsel %vm1608, %v3443, %v3009
      %v3476 = vsel %vm1608, %v3444, %v3011
      %v3477 = vsel %vm1608, %v3445, %v3013
      %v3478 = vsel %vm1608, %v3446, %v3015
      %v3479 = vsel %vm1608, %v3447, %v3017
      %v3480 = vsel %vm1608, %v3448, %v3019
      %v3481 = vsel %vm1608, %v3449, %v3021
      %v3482 = vsel %vm1608, %v3450, %v3023
      %v3483 = vsel %vm1608, %v3451, %v3025
      %v3484 = vsel %vm1641, %v3452, %v3059
      %v3485 = vsel %vm1641, %v3453, %v3061
      %v3486 = vsel %vm1641, %v3454, %v3063
      %v3487 = vsel %vm1641, %v3455, %v3065
      %v3488 = vsel %vm1641, %v3456, %v3067
      %v3489 = vsel %vm1641, %v3457, %v3069
      %v3490 = vsel %vm1641, %v3458, %v3071
      %v3491 = vsel %vm1641, %v3459, %v3073
      %v3492 = vsel %vm1641, %v3460, %v3075
      %v3493 = vsel %vm1641, %v3461, %v3077
      %v3494 = vsel %vm1641, %v3462, %v3079
      %v3495 = vsel %vm1641, %v3463, %v3081
      %v3496 = vsel %vm1641, %v3464, %v3083
      %v3497 = vsel %vm1641, %v3465, %v3085
      %v3498 = vsel %vm1641, %v3466, %v3087
      %v3499 = vsel %vm1641, %v3467, %v3089
      %v3500 = vsel %vm1641, %v3468, %v3091
      %v3501 = vsel %vm1641, %v3469, %v3093
      %v3502 = vsel %vm1641, %v3470, %v3095
      %v3503 = vsel %vm1641, %v3471, %v3097
      %v3504 = vsel %vm1641, %v3472, %v3099
      %v3505 = vsel %vm1641, %v3473, %v3101
      %v3506 = vsel %vm1641, %v3474, %v3103
      %v3507 = vsel %vm1641, %v3475, %v3105
      %v3508 = vsel %vm1641, %v3476, %v3107
      %v3509 = vsel %vm1641, %v3477, %v3109
      %v3510 = vsel %vm1641, %v3478, %v3111
      %v3511 = vsel %vm1641, %v3479, %v3113
      %v3512 = vsel %vm1641, %v3480, %v3115
      %v3513 = vsel %vm1641, %v3481, %v3117
      %v3514 = vsel %vm1641, %v3482, %v3111
      %v3515 = vsel %vm1641, %v3483, %v3113
      %v3516 = vsel %vm1674, %v3484, %v3149
      %v3517 = vsel %vm1674, %v3485, %v3151
      %v3518 = vsel %vm1674, %v3486, %v3153
      %v3519 = vsel %vm1674, %v3487, %v3155
      %v3520 = vsel %vm1674, %v3488, %v3157
      %v3521 = vsel %vm1674, %v3489, %v3159
      %v3522 = vsel %vm1674, %v3490, %v3161
      %v3523 = vsel %vm1674, %v3491, %v3163
      %v3524 = vsel %vm1674, %v3492, %v3165
      %v3525 = vsel %vm1674, %v3493, %v3167
      %v3526 = vsel %vm1674, %v3494, %v3169
      %v3527 = vsel %vm1674, %v3495, %v3171
      %v3528 = vsel %vm1674, %v3496, %v3173
      %v3529 = vsel %vm1674, %v3497, %v3175
      %v3530 = vsel %vm1674, %v3498, %v3177
      %v3531 = vsel %vm1674, %v3499, %v3179
      %v3532 = vsel %vm1674, %v3500, %v3181
      %v3533 = vsel %vm1674, %v3501, %v3183
      %v3534 = vsel %vm1674, %v3502, %v3185
      %v3535 = vsel %vm1674, %v3503, %v3187
      %v3536 = vsel %vm1674, %v3504, %v3189
      %v3537 = vsel %vm1674, %v3505, %v3191
      %v3538 = vsel %vm1674, %v3506, %v3193
      %v3539 = vsel %vm1674, %v3507, %v3195
      %v3540 = vsel %vm1674, %v3508, %v3197
      %v3541 = vsel %vm1674, %v3509, %v3199
      %v3542 = vsel %vm1674, %v3510, %v3201
      %v3543 = vsel %vm1674, %v3511, %v3203
      %v3544 = vsel %vm1674, %v3512, %v3205
      %v3545 = vsel %vm1674, %v3513, %v3207
      %v3546 = vsel %vm1674, %v3514, %v3201
      %v3547 = vsel %vm1674, %v3515, %v3203
      %v3548 = vsel %vm1707, %v3516, %v3239
      %v3549 = vsel %vm1707, %v3517, %v3241
      %v3550 = vsel %vm1707, %v3518, %v3243
      %v3551 = vsel %vm1707, %v3519, %v3245
      %v3552 = vsel %vm1707, %v3520, %v3247
      %v3553 = vsel %vm1707, %v3521, %v3249
      %v3554 = vsel %vm1707, %v3522, %v3251
      %v3555 = vsel %vm1707, %v3523, %v3253
      %v3556 = vsel %vm1707, %v3524, %v3255
      %v3557 = vsel %vm1707, %v3525, %v3257
      %v3558 = vsel %vm1707, %v3526, %v3259
      %v3559 = vsel %vm1707, %v3527, %v3261
      %v3560 = vsel %vm1707, %v3528, %v3263
      %v3561 = vsel %vm1707, %v3529, %v3265
      %v3562 = vsel %vm1707, %v3530, %v3267
      %v3563 = vsel %vm1707, %v3531, %v3269
      %v3564 = vsel %vm1707, %v3532, %v3271
      %v3565 = vsel %vm1707, %v3533, %v3273
      %v3566 = vsel %vm1707, %v3534, %v3275
      %v3567 = vsel %vm1707, %v3535, %v3277
      %v3568 = vsel %vm1707, %v3536, %v3279
      %v3569 = vsel %vm1707, %v3537, %v3281
      %v3570 = vsel %vm1707, %v3538, %v3283
      %v3571 = vsel %vm1707, %v3539, %v3285
      %v3572 = vsel %vm1707, %v3540, %v3287
      %v3573 = vsel %vm1707, %v3541, %v3289
      %v3574 = vsel %vm1707, %v3542, %v3291
      %v3575 = vsel %vm1707, %v3543, %v3293
      %v3576 = vsel %vm1707, %v3544, %v3295
      %v3577 = vsel %vm1707, %v3545, %v3297
      %v3578 = vsel %vm1707, %v3546, %v3291
      %v3579 = vsel %vm1707, %v3547, %v3293
      %v3580 = vld [vmem:[%s3] sm:$0xf]
      %v3581 = vld [vmem:[%s4] sm:$0xf]
      %3583 = vset.pattern.permute.xlu0 0
      %3584 = vperm.xlu0 %3583, %v3581
      %v3585 = vpop.permute.xlu0 %3584
      %v3588 = vsel %vm1752, %v3580, 0
      %v3591 = vsel %vm1752, %v3548, 0
      %v3594 = vsel %vm1752, %v3549, 0
      %v3597 = vsel %vm1752, %v3550, 0
      %v3600 = vsel %vm1752, %v3551, 0
      %v3603 = vsel %vm1752, %v3552, 0
      %v3606 = vsel %vm1752, %v3553, 0
      %v3609 = vsel %vm1752, %v3554, 0
      %v3612 = vsel %vm1752, %v3555, 0
      %v3615 = vsel %vm1752, %v3556, 0
      %v3618 = vsel %vm1752, %v3557, 0
      %v3621 = vsel %vm1752, %v3558, 0
      %v3624 = vsel %vm1752, %v3559, 0
      %v3627 = vsel %vm1752, %v3560, 0
      %v3630 = vsel %vm1752, %v3561, 0
      %v3633 = vsel %vm1752, %v3562, 0
      %v3636 = vsel %vm1752, %v3563, 0
      %v3639 = vsel %vm1752, %v3564, 0
      %v3642 = vsel %vm1752, %v3565, 0
      %v3645 = vsel %vm1752, %v3566, 0
      %v3648 = vsel %vm1752, %v3567, 0
      %v3651 = vsel %vm1752, %v3568, 0
      %v3654 = vsel %vm1752, %v3569, 0
      %v3657 = vsel %vm1752, %v3570, 0
      %v3660 = vsel %vm1752, %v3571, 0
      %v3663 = vsel %vm1752, %v3572, 0
      %v3666 = vsel %vm1752, %v3573, 0
      %v3669 = vsel %vm1752, %v3574, 0
      %v3672 = vsel %vm1752, %v3575, 0
      %v3675 = vsel %vm1752, %v3576, 0
      %v3678 = vsel %vm1752, %v3577, 0
      %v3681 = vsel %vm1752, %v3578, 0
      %v3684 = vsel %vm1752, %v3579, 0
      %3686 = vmatprep.subr.mxu0 0.0
      %3687 = vmatpush1.xpose.msra.mxu0 %v3591
      %3688 = vmatprep.subr.mxu0 0.0
      %3689 = vmatpush1.xpose.msra.mxu0 %v3594
      %3690 = vmatprep.subr.mxu0 0.0
      %3691 = vmatpush1.xpose.msra.mxu0 %v3597
      %3692 = vmatprep.subr.mxu0 0.0
      %3693 = vmatpush1.xpose.msra.mxu0 %v3600
      %3694 = vmatprep.subr.mxu0 0.0
      %3695 = vmatpush1.xpose.msra.mxu0 %v3603
      %3696 = vmatprep.subr.mxu0 0.0
      %3697 = vmatpush1.xpose.msra.mxu0 %v3606
      %3698 = vmatprep.subr.mxu0 0.0
      %3699 = vmatpush1.xpose.msra.mxu0 %v3609
      %3700 = vmatprep.subr.mxu0 0.0
      %3701 = vmatpush1.xpose.msra.mxu0 %v3612
      %3702 = vmatprep.subr.mxu0 0.0
      %3703 = vmatpush1.xpose.msra.mxu0 %v3615
      %3704 = vmatprep.subr.mxu0 0.0
      %3705 = vmatpush1.xpose.msra.mxu0 %v3618
      %3706 = vmatprep.subr.mxu0 0.0
      %3707 = vmatpush1.xpose.msra.mxu0 %v3621
      %3708 = vmatprep.subr.mxu0 0.0
      %3709 = vmatpush1.xpose.msra.mxu0 %v3624
      %3710 = vmatprep.subr.mxu0 0.0
      %3711 = vmatpush1.xpose.msra.mxu0 %v3627
      %3712 = vmatprep.subr.mxu0 0.0
      %3713 = vmatpush1.xpose.msra.mxu0 %v3630
      %3714 = vmatprep.subr.mxu0 0.0
      %3715 = vmatpush1.xpose.msra.mxu0 %v3633
      %3716 = vmatprep.subr.mxu0 0.0
      %3717 = vmatpush1.xpose.msra.mxu0 %v3636
      %3718 = vmatprep.subr.mxu0 0.0
      %3719 = vmatpush1.xpose.msra.mxu0 %v3639
      %3720 = vmatprep.subr.mxu0 0.0
      %3721 = vmatpush1.xpose.msra.mxu0 %v3642
      %3722 = vmatprep.subr.mxu0 0.0
      %3723 = vmatpush1.xpose.msra.mxu0 %v3645
      %3724 = vmatprep.subr.mxu0 0.0
      %3725 = vmatpush1.xpose.msra.mxu0 %v3648
      %3726 = vmatprep.subr.mxu0 0.0
      %3727 = vmatpush1.xpose.msra.mxu0 %v3651
      %3728 = vmatprep.subr.mxu0 0.0
      %3729 = vmatpush1.xpose.msra.mxu0 %v3654
      %3730 = vmatprep.subr.mxu0 0.0
      %3731 = vmatpush1.xpose.msra.mxu0 %v3657
      %3732 = vmatprep.subr.mxu0 0.0
      %3733 = vmatpush1.xpose.msra.mxu0 %v3660
      %3734 = vmatprep.subr.mxu0 0.0
      %3735 = vmatpush1.xpose.msra.mxu0 %v3663
      %3736 = vmatprep.subr.mxu0 0.0
      %3737 = vmatpush1.xpose.msra.mxu0 %v3666
      %3738 = vmatprep.subr.mxu0 0.0
      %3739 = vmatpush1.xpose.msra.mxu0 %v3669
      %3740 = vmatprep.subr.mxu0 0.0
      %3741 = vmatpush1.xpose.msra.mxu0 %v3672
      %3742 = vmatprep.subr.mxu0 0.0
      %3743 = vmatpush1.xpose.msra.mxu0 %v3675
      %3744 = vmatprep.subr.mxu0 0.0
      %3745 = vmatpush1.xpose.msra.mxu0 %v3678
      %3746 = vmatprep.subr.mxu0 0.0
      %3747 = vmatpush1.xpose.msra.mxu0 %v3681
      %3748 = vmatprep.subr.mxu0 0.0
      %3749 = vmatpush1.xpose.msra.mxu0 %v3684
      %3750 = vmatprep.mubr.f32.mxu0 0.0
      %3751 = vmatmul.mubr.f32.gmra.mrb[0].mxu0 %v3588
      %v3752 = vpop.f32.mrb[0].mxu0
      %v3753 = vadd.f32 %v3585, %v3752
      %v3754 = vpop.f32.mrb[0].mxu0
      %v3755 = vadd.f32 %v3585, %v3754
      %3756 = vdwg.mxu0
      %v3757 = vmul.f32 %v3753, 0.1
      %v3758 = vmul.f32 %v3755, 0.1
      %v3759 = vadd.f32 %v3757, %v253
      %v3760 = vadd.f32 %v3758, %v255
      %v3763 = vcombine.low %v3759, %v3760
      %3765 = vst [vmem:[%s252] sm:$0xff] %v3763
      %p3766 = scmp.lt.s32.totalorder %s18, 1
      %s3767 = scalar_select %p3766, %s18, 1
      %s3768 = smul.addr %s3767, 2
      %s3769 = smul.addr %s3768, 4
      %s3770 = scalar_lea.vmem %s6, %s3769
      // Predicated region
      $region45: #{residual_block.1} parent=43 // pred_check
        %p3771 = pneg %p167
      $region46: #{residual_block.1} parent=43 // pred_check_branch
        %3773 = sbr.rel (%p3771) target = $region48
      $region47: #{residual_block.1} parent=43 // pred_region
        _
      $region48: #{residual_block.1} parent=43 // pred_fallthru
        _
    $region44: #{residual_block.1} parent=5 // pred_fallthru
      _
    %p3774 = scmp.le.s32.totalorder 2, %s13
    // Predicated region
    $region49: #{residual_block.1} parent=5 // pred_check
      %p3775 = pneg %p3774
    $region50: #{residual_block.1} parent=5 // pred_check_branch
      %3777 = sbr.rel (%p3775) target = $region52
    $region51: #{residual_block.1} parent=5 // pred_region
      %s3778 = ssub.s32 %s13, 2
      // Predicated region
      $region53: #{residual_block.1} parent=51 // pred_check
        %p3779 = pneg %p173
      $region54: #{residual_block.1} parent=51 // pred_check_branch
        %3781 = sbr.rel (%p3779) target = $region56
      $region55: #{residual_block.1} parent=51 // pred_region
        %p3782 = scmp.lt.s32.totalorder %s19, 1
        %s3783 = scalar_select %p3782, %s19, 1
        %s3784 = smul.addr %s3783, 2
        %s3785 = smul.addr %s3784, 4
        %s3786 = scalar_lea.vmem %s6, %s3785
      $region56: #{residual_block.1} parent=51 // pred_fallthru
        _
    $region52: #{residual_block.1} parent=5 // pred_fallthru
      _
  $region6: #{residual_block.1} parent=0 // loop_footer
    %s17 = sadd.s32 1, %s13
  $region7: #{residual_block.1} parent=0 // loop_footer_branch
    %12 = sbr.rel target = $region3
  $region8: #{residual_block.1} parent=0 // loop_exit
    _

</llo_original>
